<compile_context>
chip_gen: v7x
topology: tpu7x:2x2x1
jax: 0.10.0
libtpu: 0.0.40
codegen_flags: <defaults>
</compile_context>

<pallas_src>
import jax
import jax.numpy as jnp
from jax.experimental import pallas as pl
from jax.experimental.pallas import tpu as pltpu

# sym4 MODWT filters (fixed constants from MODWTLayer.__init__)
H0 = [-0.075765714789273, -0.029635527645998, 0.497618667632015, 0.803738751805216,
      0.297857795605542, -0.099219543576847, -0.012603967262261, 0.032223100604042]
H1 = [-0.032223100604042, -0.012603967262261, 0.099219543576847, 0.297857795605542,
      -0.803738751805216, 0.497618667632015, 0.029635527645998, -0.075765714789273]

CH = 8        # channel count of every conv / transposed conv in the module
HID = 8       # LSTM hidden size
EPS_BN = 1e-5
EPS_LN = 1e-5


def _vspec(shape):
    nd = len(shape)
    return pl.BlockSpec(shape, lambda i, _nd=nd: (0,) * _nd)


def _sspec():
    return pl.BlockSpec(memory_space=pltpu.MemorySpace.SMEM)


# ---------------------------------------------------------------------------
# One-time parameter packing (plain JAX, outside the hot path)
# ---------------------------------------------------------------------------
def _conv_as_matmul(w, l_in, stride, padding):
    """Conv1d weight (Cout, Cin, K) -> M (Cin*l_in, Cout*l_out) with
       y[b, co*l_out+n] = sum_{ci,m} x[b, ci*l_in+m] * M[ci*l_in+m, co*l_out+n]."""
    c_out, c_in, k = w.shape
    l_out = (l_in + 2 * padding - k) // stride + 1
    m = jnp.arange(l_in)[:, None]
    n = jnp.arange(l_out)[None, :]
    tap = m - stride * n + padding
    valid = (tap >= 0) & (tap < k)
    g = jnp.where(valid[None, None], w[:, :, jnp.clip(tap, 0, k - 1)], 0.0)
    return jnp.transpose(g, (1, 2, 0, 3)).reshape(c_in * l_in, c_out * l_out), l_out


def _tconv_as_matmul(w, l_in, stride, padding):
    """ConvTranspose1d weight (Cin, Cout, K) -> M (Cin*l_in, Cout*l_out) (same layout)."""
    c_in, c_out, k = w.shape
    l_out = (l_in - 1) * stride - 2 * padding + k
    m = jnp.arange(l_in)[:, None]
    n = jnp.arange(l_out)[None, :]
    tap = n - stride * m + padding
    valid = (tap >= 0) & (tap < k)
    g = jnp.where(valid[None, None], w[:, :, jnp.clip(tap, 0, k - 1)], 0.0)
    return jnp.transpose(g, (0, 2, 1, 3)).reshape(c_in * l_in, c_out * l_out), l_out


def _modwt_matrix(h, u, n):
    """Banded (n, n) matrix with (x @ M)[j] = sum_t h[t] * x[j + t*u - (4u-1)],
       matching F.conv1d(padding='same') on the zero-upsampled length-8u filter."""
    h = jnp.asarray(h, jnp.float32)
    mm = jnp.arange(n)[:, None]
    nn = jnp.arange(n)[None, :]
    diff = mm - nn + (4 * u - 1)
    t = diff // u
    valid = (diff >= 0) & (diff % u == 0) & (t < 8)
    return jnp.where(valid, h[jnp.clip(t, 0, 7)], 0.0)


def pack_params(p, n, batch):
    """Convert PyTorch-layout parameters into kernel-ready packed weights for
       input length n and batch size `batch`.  Called once, outside the forward."""
    f32 = jnp.float32
    H = HID
    kp = {}

    # ---- MODWT details (levels 3..5), LayerNorm centering folded in -> one (n, 3n) matrix ----
    acc = jnp.eye(n, dtype=f32)
    details = []
    for lvl in range(5):
        u = 2 ** lvl
        if lvl >= 2:                               # selected_levels = (3, 4, 5)
            details.append(acc @ _modwt_matrix(H1, u, n))
        acc = acc @ _modwt_matrix(H0, u, n)
    md = jnp.stack(details, axis=0)                # (3, n, n)
    md = md - jnp.mean(md, axis=0, keepdims=True)  # fold LN centering: d_k - mean_k(d)
    kp['w_modwt'] = jnp.concatenate([md[0], md[1], md[2]], axis=1)     # (n, 3n)

    def _lr(a, axis):
        # left / right shifted copies = the two operands of
        # MaxPool1d(kernel=2, stride=1, padding=1, dilation=2), folded into the conv columns.
        return jnp.concatenate([jnp.roll(a, 1, axis=axis),
                                jnp.roll(a, -1, axis=axis)], axis=axis)

    # ---- conv2 + LayerNorm gamma/beta fold + BN2(eval); columns duplicated for maxpool1 ----
    m2, l2 = _conv_as_matmul(p['conv2_w'], n, stride=8, padding=28)    # (3n, CH*l2)
    gamma_rows = jnp.repeat(p['ln_gamma'], n)[:, None]
    beta_rows = jnp.repeat(p['ln_beta'], n)[:, None]
    b2 = jnp.repeat(p['conv2_b'], l2) + jnp.sum(m2 * beta_rows, axis=0)
    s2 = jnp.repeat(p['bn2_gamma'] * jax.lax.rsqrt(p['bn2_var'] + EPS_BN), l2)
    t2 = jnp.repeat(p['bn2_beta'], l2) - jnp.repeat(p['bn2_mean'], l2) * s2
    kp['w_conv2'] = _lr(m2 * gamma_rows, 1)        # (3n, 2*CH*l2)
    kp['b2'] = _lr(b2, 0)[None, :]
    kp['s2'] = _lr(s2, 0)[None, :]
    kp['t2'] = _lr(t2, 0)[None, :]

    # ---- conv3 + BN3(eval); columns duplicated for maxpool2 ----
    m3, l3 = _conv_as_matmul(p['conv3_w'], l2, stride=4, padding=14)   # (CH*l2, CH*l3)
    b3 = jnp.repeat(p['conv3_b'], l3)
    s3 = jnp.repeat(p['bn3_gamma'] * jax.lax.rsqrt(p['bn3_var'] + EPS_BN), l3)
    t3 = jnp.repeat(p['bn3_beta'], l3) - jnp.repeat(p['bn3_mean'], l3) * s3
    kp['w_conv3'] = _lr(m3, 1)                     # (CH*l2, 2*CH*l3)
    kp['b3'] = _lr(b3, 0)[None, :]
    kp['s3'] = _lr(s3, 0)[None, :]
    kp['t3'] = _lr(t3, 0)[None, :]

    # ---- transposed convs ----
    mt1, lt1 = _tconv_as_matmul(p['tconv1_w'], l3, stride=4, padding=14)
    kp['w_tconv1'] = mt1                           # (CH*l3, CH*lt1)
    kp['bt1'] = jnp.repeat(p['tconv1_b'], lt1)[None, :]
    mt2, lt2 = _tconv_as_matmul(p['tconv2_w'], lt1, stride=8, padding=28)
    assert lt2 == n, (lt2, n)
    kp['w_tconv2'] = mt2                           # (CH*lt1, CH*n); bias folded into LSTM biases

    # ---- BiLSTM packed for the stacked (both-direction) recurrence ----
    # Input projection: direction-major stack so one broadcast per input feature feeds both dirs.
    kp['w_ih'] = jnp.concatenate([p['lstm_wih_f'], p['lstm_wih_r']], axis=0)     # (8H, CH)
    # Recurrent matrix: gate-major interleave [i_f,i_r,f_f,f_r,g_f,g_r,o_f,o_r],
    # block-diagonal over directions; stacked biases with the tconv2 bias folded in.
    whh = jnp.zeros((8 * H, 2 * H), f32)
    b_f = p['lstm_bih_f'] + p['lstm_bhh_f'] + p['lstm_wih_f'] @ p['tconv2_b']
    b_r = p['lstm_bih_r'] + p['lstm_bhh_r'] + p['lstm_wih_r'] @ p['tconv2_b']
    b_blocks = []
    for g in range(4):
        whh = whh.at[2 * g * H:(2 * g + 1) * H, 0:H].set(p['lstm_whh_f'][g * H:(g + 1) * H])
        whh = whh.at[(2 * g + 1) * H:(2 * g + 2) * H, H:2 * H].set(p['lstm_whh_r'][g * H:(g + 1) * H])
        b_blocks.append(b_f[g * H:(g + 1) * H])
        b_blocks.append(b_r[g * H:(g + 1) * H])
    kp['w_hh'] = whh
    kp['b_lstm'] = jnp.concatenate(b_blocks)[:, None]                            # (8H, 1)

    # ---- fc1 -> fc2 -> fc3 collapsed to (2H -> 1), pre-scattered per LSTM step ----
    wh = p['fc3_w'] @ p['fc2_w'] @ p['fc1_w']                                    # (1, 2H)
    whead = jnp.zeros((batch, batch, 2 * H), f32)
    for s in range(batch):
        whead = whead.at[s, s, 0:H].set(wh[0, 0:H])                    # fw hidden of step s -> out row s
        whead = whead.at[s, batch - 1 - s, H:2 * H].set(wh[0, H:2 * H])  # rv hidden -> out row batch-1-s
    kp['w_head'] = whead                                                          # (B, B, 2H)
    kp['b_head'] = (p['fc1_b'] @ p['fc2_w'].T @ p['fc3_w'].T
                    + p['fc2_b'] @ p['fc3_w'].T + p['fc3_b'])                     # (1,)

    return {k: jnp.asarray(v, f32) for k, v in kp.items()}


# ---------------------------------------------------------------------------
# Single fused forward kernel
# ---------------------------------------------------------------------------
def _fused_forward_kernel(x_ref, wm_ref,
                          wc2_ref, b2_ref, s2_ref, t2_ref,
                          wc3_ref, b3_ref, s3_ref, t3_ref,
                          wt1_ref, bt1_ref, wt2_ref,
                          wih_ref, whh_ref, bstk_ref, whead_ref,
                          bh_ref, o_ref):
    B, N = x_ref.shape            # B doubles as LSTM sequence length (batch_first=False)
    H = HID

    def conv_bn_pool(inp, w_ref, b_ref, s_ref, t_ref):
        """[conv with left|right-shifted column copies] -> ReLU -> BN(eval) ->
           MaxPool1d(kernel=2, stride=1, padding=1, dilation=2) per channel block."""
        y = jnp.dot(inp, w_ref[...], preferred_element_type=jnp.float32) + b_ref[...]
        y = jnp.maximum(y, 0.0) * s_ref[...] + t_ref[...]
        w = y.shape[1] // 2
        seg = w // CH
        left, right = y[:, 0:w], y[:, w:2 * w]
        j = jax.lax.broadcasted_iota(jnp.int32, (inp.shape[0], w), 1) % seg
        return jnp.maximum(jnp.where(j >= 1, left, -jnp.inf),
                           jnp.where(j <= seg - 2, right, -jnp.inf))

    x = x_ref[...]                                                     # (B, N)

    # ---- MODWT levels 3..5 (LayerNorm centering pre-folded): one matmul -> (B, 3N) ----
    c = jnp.dot(x, wm_ref[...], preferred_element_type=jnp.float32)
    c0, c1, c2 = c[:, 0:N], c[:, N:2 * N], c[:, 2 * N:3 * N]
    inv = jax.lax.rsqrt((c0 * c0 + c1 * c1 + c2 * c2) * (1.0 / 3.0) + EPS_LN)
    u = jnp.concatenate([c0 * inv, c1 * inv, c2 * inv], axis=1)        # LN gamma/beta folded into wc2/b2
    # dropout1 / dropout2: identity (eval mode)

    # ---- conv2 -> ReLU -> BN2 -> maxpool1, conv3 -> ReLU -> BN3 -> maxpool2 (1 matmul each) ----
    h2 = conv_bn_pool(u, wc2_ref, b2_ref, s2_ref, t2_ref)              # (B, CH*L2)
    h3 = conv_bn_pool(h2, wc3_ref, b3_ref, s3_ref, t3_ref)             # (B, CH*L3)

    # ---- transposed_conv1 + ReLU; transposed_conv2 (bias folded into LSTM gate biases) ----
    h4 = jnp.maximum(jnp.dot(h3, wt1_ref[...], preferred_element_type=jnp.float32)
                     + bt1_ref[...], 0.0)                              # (B, CH*L2)
    h5 = jnp.dot(h4, wt2_ref[...], preferred_element_type=jnp.float32)  # (B, CH*N)

    # ---- BiLSTM: seq axis = original batch axis, LSTM batch (=N) in lanes ----
    # Hoisted input projections (one shared broadcast per feature feeds both directions),
    # computed entirely before the recurrence.
    wih = wih_ref[...]                                                 # (8H, CH) = [W_ih_f; W_ih_r]
    zin = []
    for t in range(B):
        acc = wih[:, 0:1] * h5[t:t + 1, 0:N]
        for co in range(1, CH):
            acc = acc + wih[:, co:co + 1] * h5[t:t + 1, co * N:(co + 1) * N]
        zin.append(acc)                                                # (8H, N)

    # Per-step stacked gate inputs: gate-major interleave of fw(t=s) and rv(t=B-1-s) + biases.
    bstk = bstk_ref[...]                                               # (8H, 1)

    def stacked_input(s):
        zf, zr = zin[s], zin[B - 1 - s]
        parts = []
        for g in range(4):
            parts.append(zf[g * H:(g + 1) * H])                        # forward gate g
            parts.append(zr[4 * H + g * H:4 * H + (g + 1) * H])        # reverse gate g
        return jnp.concatenate(parts, axis=0) + bstk

    zsteps = [stacked_input(s) for s in range(B)]

    # Both directions as ONE stacked recurrence: one (8H,2H)@(2H,N) matmul + one gate bank/step.
    whh = whh_ref[...]
    out = None
    h_state = None
    c_state = None
    for s in range(B):
        z = zsteps[s] if s == 0 else zsteps[s] + jnp.dot(
            whh, h_state, preferred_element_type=jnp.float32)          # (8H, N)
        i = jax.nn.sigmoid(z[0:2 * H])
        f = jax.nn.sigmoid(z[2 * H:4 * H])
        g = jnp.tanh(z[4 * H:6 * H])
        o = jax.nn.sigmoid(z[6 * H:8 * H])
        c_state = i * g if s == 0 else f * c_state + i * g
        h_state = o * jnp.tanh(c_state)
        # collapsed fc1->fc2->fc3 head, pre-scattered to the right output rows per step
        head = jnp.dot(whead_ref[s], h_state, preferred_element_type=jnp.float32)  # (B, N)
        out = head if s == 0 else out + head

    o_ref[...] = out + bh_ref[0]                                       # single full-block store


# ---------------------------------------------------------------------------
# Wrapper: one pallas_call for the whole forward pass
# ---------------------------------------------------------------------------
def forward(x, kp):
    """x: (B, 1, N) float32 -> (B, 1, N).  kp: output of pack_params(params, N, B)."""
    B, _, N = x.shape
    args = (x[:, 0, :].astype(jnp.float32),
            kp['w_modwt'],
            kp['w_conv2'], kp['b2'], kp['s2'], kp['t2'],
            kp['w_conv3'], kp['b3'], kp['s3'], kp['t3'],
            kp['w_tconv1'], kp['bt1'], kp['w_tconv2'],
            kp['w_ih'], kp['w_hh'], kp['b_lstm'], kp['w_head'],
            kp['b_head'])
    smem_idx = {len(args) - 1}        # b_head scalar lives in SMEM
    in_specs = [(_sspec() if i in smem_idx else _vspec(a.shape))
                for i, a in enumerate(args)]
    out = pl.pallas_call(
        _fused_forward_kernel,
        grid=(1,),
        in_specs=in_specs,
        out_specs=_vspec((B, N)),
        out_shape=jax.ShapeDtypeStruct((B, N), jnp.float32),
    )(*args)
    return out.reshape(B, 1, N)


# ---------------------------------------------------------------------------
# Deterministic example parameters (PyTorch layouts)
# ---------------------------------------------------------------------------
def init_params(key):
    ks = iter(jax.random.split(key, 40))

    def nrm(shape, scale):
        return (scale * jax.random.normal(next(ks), shape, dtype=jnp.float32)).astype(jnp.float32)

    H = HID
    p = {}
    p['ln_gamma'] = 1.0 + 0.1 * nrm((3,), 1.0)
    p['ln_beta'] = 0.1 * nrm((3,), 1.0)
    p['conv2_w'] = nrm((8, 3, 64), (3 * 64) ** -0.5)
    p['conv2_b'] = nrm((8,), 0.1)
    p['bn2_gamma'] = 1.0 + 0.1 * nrm((8,), 1.0)
    p['bn2_beta'] = 0.1 * nrm((8,), 1.0)
    p['bn2_mean'] = 0.1 * nrm((8,), 1.0)
    p['bn2_var'] = 1.0 + 0.1 * jnp.abs(nrm((8,), 1.0))
    p['conv3_w'] = nrm((8, 8, 32), (8 * 32) ** -0.5)
    p['conv3_b'] = nrm((8,), 0.1)
    p['bn3_gamma'] = 1.0 + 0.1 * nrm((8,), 1.0)
    p['bn3_beta'] = 0.1 * nrm((8,), 1.0)
    p['bn3_mean'] = 0.1 * nrm((8,), 1.0)
    p['bn3_var'] = 1.0 + 0.1 * jnp.abs(nrm((8,), 1.0))
    p['tconv1_w'] = nrm((8, 8, 32), (8 * 32) ** -0.5)   # (Cin, Cout, K)
    p['tconv1_b'] = nrm((8,), 0.1)
    p['tconv2_w'] = nrm((8, 8, 64), (8 * 64) ** -0.5)
    p['tconv2_b'] = nrm((8,), 0.1)
    p['lstm_wih_f'] = nrm((4 * H, 8), 8 ** -0.5)
    p['lstm_whh_f'] = nrm((4 * H, H), 8 ** -0.5)
    p['lstm_bih_f'] = nrm((4 * H,), 0.1)
    p['lstm_bhh_f'] = nrm((4 * H,), 0.1)
    p['lstm_wih_r'] = nrm((4 * H, 8), 8 ** -0.5)
    p['lstm_whh_r'] = nrm((4 * H, H), 8 ** -0.5)
    p['lstm_bih_r'] = nrm((4 * H,), 0.1)
    p['lstm_bhh_r'] = nrm((4 * H,), 0.1)
    p['fc1_w'] = nrm((4, 16), 0.25)
    p['fc1_b'] = nrm((4,), 0.1)
    p['fc2_w'] = nrm((2, 4), 0.5)
    p['fc2_b'] = nrm((2,), 0.1)
    p['fc3_w'] = nrm((1, 2), 0.5)
    p['fc3_b'] = nrm((1,), 0.1)
    return p


if __name__ == "__main__":
    B, N = 2, 64                      # (batch, channels=1, signal length)
    key = jax.random.PRNGKey(0)
    k_x, k_p = jax.random.split(key)
    x = jax.random.normal(k_x, (B, 1, N), dtype=jnp.float32)
    params = init_params(k_p)
    packed = pack_params(params, N, B)   # one-time weight packing (not in the hot path)

    y = jax.jit(forward)(x, packed)
    y = jax.block_until_ready(y)

    assert y.shape == (B, 1, N), y.shape
    assert bool(jnp.all(jnp.isfinite(y)))
    print("KERNEL_OK")
</pallas_src>

<mosaic_0001>
module attributes {stable_mosaic.version = 11 : i64} {
  func.func @_fused_forward_kernel(%arg0: i32, %arg1: memref<2x64xf32, #tpu.memory_space<vmem>>, %arg2: memref<64x192xf32, #tpu.memory_space<vmem>>, %arg3: memref<192x128xf32, #tpu.memory_space<vmem>>, %arg4: memref<1x128xf32, #tpu.memory_space<vmem>>, %arg5: memref<1x128xf32, #tpu.memory_space<vmem>>, %arg6: memref<1x128xf32, #tpu.memory_space<vmem>>, %arg7: memref<64x32xf32, #tpu.memory_space<vmem>>, %arg8: memref<1x32xf32, #tpu.memory_space<vmem>>, %arg9: memref<1x32xf32, #tpu.memory_space<vmem>>, %arg10: memref<1x32xf32, #tpu.memory_space<vmem>>, %arg11: memref<16x64xf32, #tpu.memory_space<vmem>>, %arg12: memref<1x64xf32, #tpu.memory_space<vmem>>, %arg13: memref<64x512xf32, #tpu.memory_space<vmem>>, %arg14: memref<64x8xf32, #tpu.memory_space<vmem>>, %arg15: memref<64x16xf32, #tpu.memory_space<vmem>>, %arg16: memref<64x1xf32, #tpu.memory_space<vmem>>, %arg17: memref<2x2x16xf32, #tpu.memory_space<vmem>>, %arg18: memref<1xf32, #tpu.memory_space<smem>>, %arg19: memref<2x64xf32, #tpu.memory_space<vmem>>) attributes {dimension_semantics = [#tpu.dimension_semantics<arbitrary>], iteration_bounds = array<i64: 1>, scalar_prefetch = 0 : i64, scratch_operands = 0 : i64, tpu.core_type = #tpu.core_type<tc>, window_params = [{pipeline_mode = #tpu.pipeline_mode<synchronous>, transform_indices = @transform_0, window_bounds = array<i64: 2, 64>}, {pipeline_mode = #tpu.pipeline_mode<synchronous>, transform_indices = @transform_1, window_bounds = array<i64: 64, 192>}, {pipeline_mode = #tpu.pipeline_mode<synchronous>, transform_indices = @transform_2, window_bounds = array<i64: 192, 128>}, {pipeline_mode = #tpu.pipeline_mode<synchronous>, transform_indices = @transform_3, window_bounds = array<i64: 1, 128>}, {pipeline_mode = #tpu.pipeline_mode<synchronous>, transform_indices = @transform_4, window_bounds = array<i64: 1, 128>}, {pipeline_mode = #tpu.pipeline_mode<synchronous>, transform_indices = @transform_5, window_bounds = array<i64: 1, 128>}, {pipeline_mode = #tpu.pipeline_mode<synchronous>, transform_indices = @transform_6, window_bounds = array<i64: 64, 32>}, {pipeline_mode = #tpu.pipeline_mode<synchronous>, transform_indices = @transform_7, window_bounds = array<i64: 1, 32>}, {pipeline_mode = #tpu.pipeline_mode<synchronous>, transform_indices = @transform_8, window_bounds = array<i64: 1, 32>}, {pipeline_mode = #tpu.pipeline_mode<synchronous>, transform_indices = @transform_9, window_bounds = array<i64: 1, 32>}, {pipeline_mode = #tpu.pipeline_mode<synchronous>, transform_indices = @transform_10, window_bounds = array<i64: 16, 64>}, {pipeline_mode = #tpu.pipeline_mode<synchronous>, transform_indices = @transform_11, window_bounds = array<i64: 1, 64>}, {pipeline_mode = #tpu.pipeline_mode<synchronous>, transform_indices = @transform_12, window_bounds = array<i64: 64, 512>}, {pipeline_mode = #tpu.pipeline_mode<synchronous>, transform_indices = @transform_13, window_bounds = array<i64: 64, 8>}, {pipeline_mode = #tpu.pipeline_mode<synchronous>, transform_indices = @transform_14, window_bounds = array<i64: 64, 16>}, {pipeline_mode = #tpu.pipeline_mode<synchronous>, transform_indices = @transform_15, window_bounds = array<i64: 64, 1>}, {pipeline_mode = #tpu.pipeline_mode<synchronous>, transform_indices = @transform_16, window_bounds = array<i64: 2, 2, 16>}, {transform_indices = @transform_17, window_bounds = array<i64: 1>}, {pipeline_mode = #tpu.pipeline_mode<synchronous>, transform_indices = @transform_18, window_bounds = array<i64: 2, 64>}]} {
    %c0 = arith.constant 0 : index
    %c0_0 = arith.constant 0 : index
    %0 = vector.load %arg1[%c0, %c0_0] : memref<2x64xf32, #tpu.memory_space<vmem>>, vector<2x64xf32>
    %c0_1 = arith.constant 0 : index
    %c0_2 = arith.constant 0 : index
    %1 = vector.load %arg2[%c0_1, %c0_2] : memref<64x192xf32, #tpu.memory_space<vmem>>, vector<64x192xf32>
    %cst = arith.constant dense<0.000000e+00> : vector<2x192xf32>
    %2 = tpu.matmul %0, %1, %cst {dimension_numbers = #tpu.dot_dimension_numbers<[1], [0], [0], [1], [0, 0, 1, 1], [], []>} : vector<2x64xf32>, vector<64x192xf32>, vector<2x192xf32> -> vector<2x192xf32>
    %3 = vector.extract_strided_slice %2 {offsets = [0, 0], sizes = [2, 64], strides = [1, 1]} : vector<2x192xf32> to vector<2x64xf32>
    %4 = vector.extract_strided_slice %2 {offsets = [0, 64], sizes = [2, 64], strides = [1, 1]} : vector<2x192xf32> to vector<2x64xf32>
    %5 = vector.extract_strided_slice %2 {offsets = [0, 128], sizes = [2, 64], strides = [1, 1]} : vector<2x192xf32> to vector<2x64xf32>
    %6 = arith.mulf %3, %3 : vector<2x64xf32>
    %7 = arith.mulf %4, %4 : vector<2x64xf32>
    %8 = arith.addf %6, %7 : vector<2x64xf32>
    %9 = arith.mulf %5, %5 : vector<2x64xf32>
    %10 = arith.addf %8, %9 : vector<2x64xf32>
    %cst_3 = arith.constant 0.333333343 : f32
    %11 = vector.broadcast %cst_3 : f32 to vector<2x64xf32>
    %12 = arith.mulf %10, %11 : vector<2x64xf32>
    %cst_4 = arith.constant 9.99999974E-6 : f32
    %13 = vector.broadcast %cst_4 : f32 to vector<2x64xf32>
    %14 = arith.addf %12, %13 : vector<2x64xf32>
    %15 = math.rsqrt %14 : vector<2x64xf32>
    %16 = arith.mulf %3, %15 : vector<2x64xf32>
    %17 = arith.mulf %4, %15 : vector<2x64xf32>
    %18 = arith.mulf %5, %15 : vector<2x64xf32>
    %19 = tpu.concatenate %16, %17, %18 in 1 : vector<2x64xf32>, vector<2x64xf32>, vector<2x64xf32> -> vector<2x192xf32>
    %c0_5 = arith.constant 0 : index
    %c0_6 = arith.constant 0 : index
    %20 = vector.load %arg3[%c0_5, %c0_6] : memref<192x128xf32, #tpu.memory_space<vmem>>, vector<192x128xf32>
    %cst_7 = arith.constant dense<0.000000e+00> : vector<2x128xf32>
    %21 = tpu.matmul %19, %20, %cst_7 {dimension_numbers = #tpu.dot_dimension_numbers<[1], [0], [0], [1], [0, 0, 1, 1], [], []>} : vector<2x192xf32>, vector<192x128xf32>, vector<2x128xf32> -> vector<2x128xf32>
    %c0_8 = arith.constant 0 : index
    %c0_9 = arith.constant 0 : index
    %22 = vector.load %arg4[%c0_8, %c0_9] : memref<1x128xf32, #tpu.memory_space<vmem>>, vector<1x128xf32>
    %23 = vector.broadcast %22 : vector<1x128xf32> to vector<2x128xf32>
    %24 = arith.addf %21, %23 : vector<2x128xf32>
    %cst_10 = arith.constant 0.000000e+00 : f32
    %25 = vector.broadcast %cst_10 : f32 to vector<2x128xf32>
    %26 = arith.maximumf %24, %25 : vector<2x128xf32>
    %c0_11 = arith.constant 0 : index
    %c0_12 = arith.constant 0 : index
    %27 = vector.load %arg5[%c0_11, %c0_12] : memref<1x128xf32, #tpu.memory_space<vmem>>, vector<1x128xf32>
    %28 = vector.broadcast %27 : vector<1x128xf32> to vector<2x128xf32>
    %29 = arith.mulf %26, %28 : vector<2x128xf32>
    %c0_13 = arith.constant 0 : index
    %c0_14 = arith.constant 0 : index
    %30 = vector.load %arg6[%c0_13, %c0_14] : memref<1x128xf32, #tpu.memory_space<vmem>>, vector<1x128xf32>
    %31 = vector.broadcast %30 : vector<1x128xf32> to vector<2x128xf32>
    %32 = arith.addf %29, %31 : vector<2x128xf32>
    %33 = vector.extract_strided_slice %32 {offsets = [0, 0], sizes = [2, 64], strides = [1, 1]} : vector<2x128xf32> to vector<2x64xf32>
    %34 = vector.extract_strided_slice %32 {offsets = [0, 64], sizes = [2, 64], strides = [1, 1]} : vector<2x128xf32> to vector<2x64xf32>
    %35 = tpu.iota {dimensions = array<i32: 1>} : vector<2x64xi32>
    %c8_i32 = arith.constant 8 : i32
    %c0_i32 = arith.constant 0 : i32
    %36 = arith.cmpi eq, %c8_i32, %c0_i32 : i32
    %c1_i32 = arith.constant 1 : i32
    %37 = arith.select %36, %c1_i32, %c8_i32 : i32
    %38 = vector.broadcast %37 : i32 to vector<2x64xi32>
    %39 = arith.remsi %35, %38 : vector<2x64xi32>
    %c0_i32_15 = arith.constant 0 : i32
    %40 = vector.broadcast %c0_i32_15 : i32 to vector<2x64xi32>
    %41 = arith.cmpi ne, %39, %40 : vector<2x64xi32>
    %c0_i32_16 = arith.constant 0 : i32
    %42 = vector.broadcast %c0_i32_16 : i32 to vector<2x64xi32>
    %43 = arith.cmpi slt, %39, %42 : vector<2x64xi32>
    %c0_i32_17 = arith.constant 0 : i32
    %44 = arith.cmpi slt, %37, %c0_i32_17 : i32
    %45 = vector.broadcast %44 : i1 to vector<2x64xi1>
    %46 = vector.broadcast %45 : vector<2x64xi1> to vector<2x64xi1>
    %47 = arith.xori %43, %46 : vector<2x64xi1>
    %48 = arith.andi %47, %41 : vector<2x64xi1>
    %49 = vector.broadcast %37 : i32 to vector<2x64xi32>
    %50 = arith.addi %39, %49 : vector<2x64xi32>
    %51 = arith.select %48, %50, %39 : vector<2x64xi1>, vector<2x64xi32>
    %c1_i32_18 = arith.constant 1 : i32
    %52 = vector.broadcast %c1_i32_18 : i32 to vector<2x64xi32>
    %53 = arith.cmpi sge, %51, %52 : vector<2x64xi32>
    %cst_19 = arith.constant 0xFF800000 : f32
    %54 = vector.broadcast %cst_19 : f32 to vector<2x64xf32>
    %55 = arith.select %53, %33, %54 : vector<2x64xi1>, vector<2x64xf32>
    %c6_i32 = arith.constant 6 : i32
    %56 = vector.broadcast %c6_i32 : i32 to vector<2x64xi32>
    %57 = arith.cmpi sle, %51, %56 : vector<2x64xi32>
    %cst_20 = arith.constant 0xFF800000 : f32
    %58 = vector.broadcast %cst_20 : f32 to vector<2x64xf32>
    %59 = arith.select %57, %34, %58 : vector<2x64xi1>, vector<2x64xf32>
    %60 = arith.maximumf %55, %59 : vector<2x64xf32>
    %c0_21 = arith.constant 0 : index
    %c0_22 = arith.constant 0 : index
    %61 = vector.load %arg7[%c0_21, %c0_22] : memref<64x32xf32, #tpu.memory_space<vmem>>, vector<64x32xf32>
    %cst_23 = arith.constant dense<0.000000e+00> : vector<2x32xf32>
    %62 = tpu.matmul %60, %61, %cst_23 {dimension_numbers = #tpu.dot_dimension_numbers<[1], [0], [0], [1], [0, 0, 1, 1], [], []>} : vector<2x64xf32>, vector<64x32xf32>, vector<2x32xf32> -> vector<2x32xf32>
    %c0_24 = arith.constant 0 : index
    %c0_25 = arith.constant 0 : index
    %63 = vector.load %arg8[%c0_24, %c0_25] : memref<1x32xf32, #tpu.memory_space<vmem>>, vector<1x32xf32>
    %64 = vector.broadcast %63 : vector<1x32xf32> to vector<2x32xf32>
    %65 = arith.addf %62, %64 : vector<2x32xf32>
    %cst_26 = arith.constant 0.000000e+00 : f32
    %66 = vector.broadcast %cst_26 : f32 to vector<2x32xf32>
    %67 = arith.maximumf %65, %66 : vector<2x32xf32>
    %c0_27 = arith.constant 0 : index
    %c0_28 = arith.constant 0 : index
    %68 = vector.load %arg9[%c0_27, %c0_28] : memref<1x32xf32, #tpu.memory_space<vmem>>, vector<1x32xf32>
    %69 = vector.broadcast %68 : vector<1x32xf32> to vector<2x32xf32>
    %70 = arith.mulf %67, %69 : vector<2x32xf32>
    %c0_29 = arith.constant 0 : index
    %c0_30 = arith.constant 0 : index
    %71 = vector.load %arg10[%c0_29, %c0_30] : memref<1x32xf32, #tpu.memory_space<vmem>>, vector<1x32xf32>
    %72 = vector.broadcast %71 : vector<1x32xf32> to vector<2x32xf32>
    %73 = arith.addf %70, %72 : vector<2x32xf32>
    %74 = vector.extract_strided_slice %73 {offsets = [0, 0], sizes = [2, 16], strides = [1, 1]} : vector<2x32xf32> to vector<2x16xf32>
    %75 = vector.extract_strided_slice %73 {offsets = [0, 16], sizes = [2, 16], strides = [1, 1]} : vector<2x32xf32> to vector<2x16xf32>
    %76 = tpu.iota {dimensions = array<i32: 1>} : vector<2x16xi32>
    %c2_i32 = arith.constant 2 : i32
    %c0_i32_31 = arith.constant 0 : i32
    %77 = arith.cmpi eq, %c2_i32, %c0_i32_31 : i32
    %c1_i32_32 = arith.constant 1 : i32
    %78 = arith.select %77, %c1_i32_32, %c2_i32 : i32
    %79 = vector.broadcast %78 : i32 to vector<2x16xi32>
    %80 = arith.remsi %76, %79 : vector<2x16xi32>
    %c0_i32_33 = arith.constant 0 : i32
    %81 = vector.broadcast %c0_i32_33 : i32 to vector<2x16xi32>
    %82 = arith.cmpi ne, %80, %81 : vector<2x16xi32>
    %c0_i32_34 = arith.constant 0 : i32
    %83 = vector.broadcast %c0_i32_34 : i32 to vector<2x16xi32>
    %84 = arith.cmpi slt, %80, %83 : vector<2x16xi32>
    %c0_i32_35 = arith.constant 0 : i32
    %85 = arith.cmpi slt, %78, %c0_i32_35 : i32
    %86 = vector.broadcast %85 : i1 to vector<2x16xi1>
    %87 = vector.broadcast %86 : vector<2x16xi1> to vector<2x16xi1>
    %88 = arith.xori %84, %87 : vector<2x16xi1>
    %89 = arith.andi %88, %82 : vector<2x16xi1>
    %90 = vector.broadcast %78 : i32 to vector<2x16xi32>
    %91 = arith.addi %80, %90 : vector<2x16xi32>
    %92 = arith.select %89, %91, %80 : vector<2x16xi1>, vector<2x16xi32>
    %c1_i32_36 = arith.constant 1 : i32
    %93 = vector.broadcast %c1_i32_36 : i32 to vector<2x16xi32>
    %94 = arith.cmpi sge, %92, %93 : vector<2x16xi32>
    %cst_37 = arith.constant 0xFF800000 : f32
    %95 = vector.broadcast %cst_37 : f32 to vector<2x16xf32>
    %96 = arith.select %94, %74, %95 : vector<2x16xi1>, vector<2x16xf32>
    %c0_i32_38 = arith.constant 0 : i32
    %97 = vector.broadcast %c0_i32_38 : i32 to vector<2x16xi32>
    %98 = arith.cmpi sle, %92, %97 : vector<2x16xi32>
    %cst_39 = arith.constant 0xFF800000 : f32
    %99 = vector.broadcast %cst_39 : f32 to vector<2x16xf32>
    %100 = arith.select %98, %75, %99 : vector<2x16xi1>, vector<2x16xf32>
    %101 = arith.maximumf %96, %100 : vector<2x16xf32>
    %c0_40 = arith.constant 0 : index
    %c0_41 = arith.constant 0 : index
    %102 = vector.load %arg11[%c0_40, %c0_41] : memref<16x64xf32, #tpu.memory_space<vmem>>, vector<16x64xf32>
    %cst_42 = arith.constant dense<0.000000e+00> : vector<2x64xf32>
    %103 = tpu.matmul %101, %102, %cst_42 {dimension_numbers = #tpu.dot_dimension_numbers<[1], [0], [0], [1], [0, 0, 1, 1], [], []>} : vector<2x16xf32>, vector<16x64xf32>, vector<2x64xf32> -> vector<2x64xf32>
    %c0_43 = arith.constant 0 : index
    %c0_44 = arith.constant 0 : index
    %104 = vector.load %arg12[%c0_43, %c0_44] : memref<1x64xf32, #tpu.memory_space<vmem>>, vector<1x64xf32>
    %105 = vector.broadcast %104 : vector<1x64xf32> to vector<2x64xf32>
    %106 = arith.addf %103, %105 : vector<2x64xf32>
    %cst_45 = arith.constant 0.000000e+00 : f32
    %107 = vector.broadcast %cst_45 : f32 to vector<2x64xf32>
    %108 = arith.maximumf %106, %107 : vector<2x64xf32>
    %c0_46 = arith.constant 0 : index
    %c0_47 = arith.constant 0 : index
    %109 = vector.load %arg13[%c0_46, %c0_47] : memref<64x512xf32, #tpu.memory_space<vmem>>, vector<64x512xf32>
    %cst_48 = arith.constant dense<0.000000e+00> : vector<2x512xf32>
    %110 = tpu.matmul %108, %109, %cst_48 {dimension_numbers = #tpu.dot_dimension_numbers<[1], [0], [0], [1], [0, 0, 1, 1], [], []>} : vector<2x64xf32>, vector<64x512xf32>, vector<2x512xf32> -> vector<2x512xf32>
    %c0_49 = arith.constant 0 : index
    %c0_50 = arith.constant 0 : index
    %111 = vector.load %arg14[%c0_49, %c0_50] : memref<64x8xf32, #tpu.memory_space<vmem>>, vector<64x8xf32>
    %112 = vector.extract_strided_slice %111 {offsets = [0, 0], sizes = [64, 1], strides = [1, 1]} : vector<64x8xf32> to vector<64x1xf32>
    %113 = vector.extract_strided_slice %110 {offsets = [0, 0], sizes = [1, 64], strides = [1, 1]} : vector<2x512xf32> to vector<1x64xf32>
    %114 = vector.broadcast %112 : vector<64x1xf32> to vector<64x64xf32>
    %115 = vector.broadcast %113 : vector<1x64xf32> to vector<64x64xf32>
    %116 = arith.mulf %114, %115 : vector<64x64xf32>
    %117 = vector.extract_strided_slice %111 {offsets = [0, 1], sizes = [64, 1], strides = [1, 1]} : vector<64x8xf32> to vector<64x1xf32>
    %118 = vector.extract_strided_slice %110 {offsets = [0, 64], sizes = [1, 64], strides = [1, 1]} : vector<2x512xf32> to vector<1x64xf32>
    %119 = vector.broadcast %117 : vector<64x1xf32> to vector<64x64xf32>
    %120 = vector.broadcast %118 : vector<1x64xf32> to vector<64x64xf32>
    %121 = arith.mulf %119, %120 : vector<64x64xf32>
    %122 = arith.addf %116, %121 : vector<64x64xf32>
    %123 = vector.extract_strided_slice %111 {offsets = [0, 2], sizes = [64, 1], strides = [1, 1]} : vector<64x8xf32> to vector<64x1xf32>
    %124 = vector.extract_strided_slice %110 {offsets = [0, 128], sizes = [1, 64], strides = [1, 1]} : vector<2x512xf32> to vector<1x64xf32>
    %125 = vector.broadcast %123 : vector<64x1xf32> to vector<64x64xf32>
    %126 = vector.broadcast %124 : vector<1x64xf32> to vector<64x64xf32>
    %127 = arith.mulf %125, %126 : vector<64x64xf32>
    %128 = arith.addf %122, %127 : vector<64x64xf32>
    %129 = vector.extract_strided_slice %111 {offsets = [0, 3], sizes = [64, 1], strides = [1, 1]} : vector<64x8xf32> to vector<64x1xf32>
    %130 = vector.extract_strided_slice %110 {offsets = [0, 192], sizes = [1, 64], strides = [1, 1]} : vector<2x512xf32> to vector<1x64xf32>
    %131 = vector.broadcast %129 : vector<64x1xf32> to vector<64x64xf32>
    %132 = vector.broadcast %130 : vector<1x64xf32> to vector<64x64xf32>
    %133 = arith.mulf %131, %132 : vector<64x64xf32>
    %134 = arith.addf %128, %133 : vector<64x64xf32>
    %135 = vector.extract_strided_slice %111 {offsets = [0, 4], sizes = [64, 1], strides = [1, 1]} : vector<64x8xf32> to vector<64x1xf32>
    %136 = vector.extract_strided_slice %110 {offsets = [0, 256], sizes = [1, 64], strides = [1, 1]} : vector<2x512xf32> to vector<1x64xf32>
    %137 = vector.broadcast %135 : vector<64x1xf32> to vector<64x64xf32>
    %138 = vector.broadcast %136 : vector<1x64xf32> to vector<64x64xf32>
    %139 = arith.mulf %137, %138 : vector<64x64xf32>
    %140 = arith.addf %134, %139 : vector<64x64xf32>
    %141 = vector.extract_strided_slice %111 {offsets = [0, 5], sizes = [64, 1], strides = [1, 1]} : vector<64x8xf32> to vector<64x1xf32>
    %142 = vector.extract_strided_slice %110 {offsets = [0, 320], sizes = [1, 64], strides = [1, 1]} : vector<2x512xf32> to vector<1x64xf32>
    %143 = vector.broadcast %141 : vector<64x1xf32> to vector<64x64xf32>
    %144 = vector.broadcast %142 : vector<1x64xf32> to vector<64x64xf32>
    %145 = arith.mulf %143, %144 : vector<64x64xf32>
    %146 = arith.addf %140, %145 : vector<64x64xf32>
    %147 = vector.extract_strided_slice %111 {offsets = [0, 6], sizes = [64, 1], strides = [1, 1]} : vector<64x8xf32> to vector<64x1xf32>
    %148 = vector.extract_strided_slice %110 {offsets = [0, 384], sizes = [1, 64], strides = [1, 1]} : vector<2x512xf32> to vector<1x64xf32>
    %149 = vector.broadcast %147 : vector<64x1xf32> to vector<64x64xf32>
    %150 = vector.broadcast %148 : vector<1x64xf32> to vector<64x64xf32>
    %151 = arith.mulf %149, %150 : vector<64x64xf32>
    %152 = arith.addf %146, %151 : vector<64x64xf32>
    %153 = vector.extract_strided_slice %111 {offsets = [0, 7], sizes = [64, 1], strides = [1, 1]} : vector<64x8xf32> to vector<64x1xf32>
    %154 = vector.extract_strided_slice %110 {offsets = [0, 448], sizes = [1, 64], strides = [1, 1]} : vector<2x512xf32> to vector<1x64xf32>
    %155 = vector.broadcast %153 : vector<64x1xf32> to vector<64x64xf32>
    %156 = vector.broadcast %154 : vector<1x64xf32> to vector<64x64xf32>
    %157 = arith.mulf %155, %156 : vector<64x64xf32>
    %158 = arith.addf %152, %157 : vector<64x64xf32>
    %159 = vector.extract_strided_slice %111 {offsets = [0, 0], sizes = [64, 1], strides = [1, 1]} : vector<64x8xf32> to vector<64x1xf32>
    %160 = vector.extract_strided_slice %110 {offsets = [1, 0], sizes = [1, 64], strides = [1, 1]} : vector<2x512xf32> to vector<1x64xf32>
    %161 = vector.broadcast %159 : vector<64x1xf32> to vector<64x64xf32>
    %162 = vector.broadcast %160 : vector<1x64xf32> to vector<64x64xf32>
    %163 = arith.mulf %161, %162 : vector<64x64xf32>
    %164 = vector.extract_strided_slice %111 {offsets = [0, 1], sizes = [64, 1], strides = [1, 1]} : vector<64x8xf32> to vector<64x1xf32>
    %165 = vector.extract_strided_slice %110 {offsets = [1, 64], sizes = [1, 64], strides = [1, 1]} : vector<2x512xf32> to vector<1x64xf32>
    %166 = vector.broadcast %164 : vector<64x1xf32> to vector<64x64xf32>
    %167 = vector.broadcast %165 : vector<1x64xf32> to vector<64x64xf32>
    %168 = arith.mulf %166, %167 : vector<64x64xf32>
    %169 = arith.addf %163, %168 : vector<64x64xf32>
    %170 = vector.extract_strided_slice %111 {offsets = [0, 2], sizes = [64, 1], strides = [1, 1]} : vector<64x8xf32> to vector<64x1xf32>
    %171 = vector.extract_strided_slice %110 {offsets = [1, 128], sizes = [1, 64], strides = [1, 1]} : vector<2x512xf32> to vector<1x64xf32>
    %172 = vector.broadcast %170 : vector<64x1xf32> to vector<64x64xf32>
    %173 = vector.broadcast %171 : vector<1x64xf32> to vector<64x64xf32>
    %174 = arith.mulf %172, %173 : vector<64x64xf32>
    %175 = arith.addf %169, %174 : vector<64x64xf32>
    %176 = vector.extract_strided_slice %111 {offsets = [0, 3], sizes = [64, 1], strides = [1, 1]} : vector<64x8xf32> to vector<64x1xf32>
    %177 = vector.extract_strided_slice %110 {offsets = [1, 192], sizes = [1, 64], strides = [1, 1]} : vector<2x512xf32> to vector<1x64xf32>
    %178 = vector.broadcast %176 : vector<64x1xf32> to vector<64x64xf32>
    %179 = vector.broadcast %177 : vector<1x64xf32> to vector<64x64xf32>
    %180 = arith.mulf %178, %179 : vector<64x64xf32>
    %181 = arith.addf %175, %180 : vector<64x64xf32>
    %182 = vector.extract_strided_slice %111 {offsets = [0, 4], sizes = [64, 1], strides = [1, 1]} : vector<64x8xf32> to vector<64x1xf32>
    %183 = vector.extract_strided_slice %110 {offsets = [1, 256], sizes = [1, 64], strides = [1, 1]} : vector<2x512xf32> to vector<1x64xf32>
    %184 = vector.broadcast %182 : vector<64x1xf32> to vector<64x64xf32>
    %185 = vector.broadcast %183 : vector<1x64xf32> to vector<64x64xf32>
    %186 = arith.mulf %184, %185 : vector<64x64xf32>
    %187 = arith.addf %181, %186 : vector<64x64xf32>
    %188 = vector.extract_strided_slice %111 {offsets = [0, 5], sizes = [64, 1], strides = [1, 1]} : vector<64x8xf32> to vector<64x1xf32>
    %189 = vector.extract_strided_slice %110 {offsets = [1, 320], sizes = [1, 64], strides = [1, 1]} : vector<2x512xf32> to vector<1x64xf32>
    %190 = vector.broadcast %188 : vector<64x1xf32> to vector<64x64xf32>
    %191 = vector.broadcast %189 : vector<1x64xf32> to vector<64x64xf32>
    %192 = arith.mulf %190, %191 : vector<64x64xf32>
    %193 = arith.addf %187, %192 : vector<64x64xf32>
    %194 = vector.extract_strided_slice %111 {offsets = [0, 6], sizes = [64, 1], strides = [1, 1]} : vector<64x8xf32> to vector<64x1xf32>
    %195 = vector.extract_strided_slice %110 {offsets = [1, 384], sizes = [1, 64], strides = [1, 1]} : vector<2x512xf32> to vector<1x64xf32>
    %196 = vector.broadcast %194 : vector<64x1xf32> to vector<64x64xf32>
    %197 = vector.broadcast %195 : vector<1x64xf32> to vector<64x64xf32>
    %198 = arith.mulf %196, %197 : vector<64x64xf32>
    %199 = arith.addf %193, %198 : vector<64x64xf32>
    %200 = vector.extract_strided_slice %111 {offsets = [0, 7], sizes = [64, 1], strides = [1, 1]} : vector<64x8xf32> to vector<64x1xf32>
    %201 = vector.extract_strided_slice %110 {offsets = [1, 448], sizes = [1, 64], strides = [1, 1]} : vector<2x512xf32> to vector<1x64xf32>
    %202 = vector.broadcast %200 : vector<64x1xf32> to vector<64x64xf32>
    %203 = vector.broadcast %201 : vector<1x64xf32> to vector<64x64xf32>
    %204 = arith.mulf %202, %203 : vector<64x64xf32>
    %205 = arith.addf %199, %204 : vector<64x64xf32>
    %c0_51 = arith.constant 0 : index
    %c0_52 = arith.constant 0 : index
    %206 = vector.load %arg16[%c0_51, %c0_52] : memref<64x1xf32, #tpu.memory_space<vmem>>, vector<64x1xf32>
    %207 = vector.extract_strided_slice %158 {offsets = [0, 0], sizes = [8, 64], strides = [1, 1]} : vector<64x64xf32> to vector<8x64xf32>
    %208 = vector.extract_strided_slice %205 {offsets = [32, 0], sizes = [8, 64], strides = [1, 1]} : vector<64x64xf32> to vector<8x64xf32>
    %209 = vector.extract_strided_slice %158 {offsets = [8, 0], sizes = [8, 64], strides = [1, 1]} : vector<64x64xf32> to vector<8x64xf32>
    %210 = vector.extract_strided_slice %205 {offsets = [40, 0], sizes = [8, 64], strides = [1, 1]} : vector<64x64xf32> to vector<8x64xf32>
    %211 = vector.extract_strided_slice %158 {offsets = [16, 0], sizes = [8, 64], strides = [1, 1]} : vector<64x64xf32> to vector<8x64xf32>
    %212 = vector.extract_strided_slice %205 {offsets = [48, 0], sizes = [8, 64], strides = [1, 1]} : vector<64x64xf32> to vector<8x64xf32>
    %213 = vector.extract_strided_slice %158 {offsets = [24, 0], sizes = [8, 64], strides = [1, 1]} : vector<64x64xf32> to vector<8x64xf32>
    %214 = vector.extract_strided_slice %205 {offsets = [56, 0], sizes = [8, 64], strides = [1, 1]} : vector<64x64xf32> to vector<8x64xf32>
    %215 = tpu.concatenate %207, %208, %209, %210, %211, %212, %213, %214 in 0 : vector<8x64xf32>, vector<8x64xf32>, vector<8x64xf32>, vector<8x64xf32>, vector<8x64xf32>, vector<8x64xf32>, vector<8x64xf32>, vector<8x64xf32> -> vector<64x64xf32>
    %216 = vector.broadcast %206 : vector<64x1xf32> to vector<64x64xf32>
    %217 = arith.addf %215, %216 : vector<64x64xf32>
    %218 = vector.extract_strided_slice %205 {offsets = [0, 0], sizes = [8, 64], strides = [1, 1]} : vector<64x64xf32> to vector<8x64xf32>
    %219 = vector.extract_strided_slice %158 {offsets = [32, 0], sizes = [8, 64], strides = [1, 1]} : vector<64x64xf32> to vector<8x64xf32>
    %220 = vector.extract_strided_slice %205 {offsets = [8, 0], sizes = [8, 64], strides = [1, 1]} : vector<64x64xf32> to vector<8x64xf32>
    %221 = vector.extract_strided_slice %158 {offsets = [40, 0], sizes = [8, 64], strides = [1, 1]} : vector<64x64xf32> to vector<8x64xf32>
    %222 = vector.extract_strided_slice %205 {offsets = [16, 0], sizes = [8, 64], strides = [1, 1]} : vector<64x64xf32> to vector<8x64xf32>
    %223 = vector.extract_strided_slice %158 {offsets = [48, 0], sizes = [8, 64], strides = [1, 1]} : vector<64x64xf32> to vector<8x64xf32>
    %224 = vector.extract_strided_slice %205 {offsets = [24, 0], sizes = [8, 64], strides = [1, 1]} : vector<64x64xf32> to vector<8x64xf32>
    %225 = vector.extract_strided_slice %158 {offsets = [56, 0], sizes = [8, 64], strides = [1, 1]} : vector<64x64xf32> to vector<8x64xf32>
    %226 = tpu.concatenate %218, %219, %220, %221, %222, %223, %224, %225 in 0 : vector<8x64xf32>, vector<8x64xf32>, vector<8x64xf32>, vector<8x64xf32>, vector<8x64xf32>, vector<8x64xf32>, vector<8x64xf32>, vector<8x64xf32> -> vector<64x64xf32>
    %227 = vector.broadcast %206 : vector<64x1xf32> to vector<64x64xf32>
    %228 = arith.addf %226, %227 : vector<64x64xf32>
    %c0_53 = arith.constant 0 : index
    %c0_54 = arith.constant 0 : index
    %229 = vector.load %arg15[%c0_53, %c0_54] : memref<64x16xf32, #tpu.memory_space<vmem>>, vector<64x16xf32>
    %230 = vector.extract_strided_slice %217 {offsets = [0, 0], sizes = [16, 64], strides = [1, 1]} : vector<64x64xf32> to vector<16x64xf32>
    %231 = arith.negf %230 : vector<16x64xf32>
    %232 = math.exp %231 : vector<16x64xf32>
    %cst_55 = arith.constant 1.000000e+00 : f32
    %233 = vector.broadcast %cst_55 : f32 to vector<16x64xf32>
    %234 = arith.addf %233, %232 : vector<16x64xf32>
    %235 = arith.divf %233, %234 : vector<16x64xf32>
    %236 = vector.extract_strided_slice %217 {offsets = [32, 0], sizes = [16, 64], strides = [1, 1]} : vector<64x64xf32> to vector<16x64xf32>
    %237 = math.tanh %236 : vector<16x64xf32>
    %238 = vector.extract_strided_slice %217 {offsets = [48, 0], sizes = [16, 64], strides = [1, 1]} : vector<64x64xf32> to vector<16x64xf32>
    %239 = arith.negf %238 : vector<16x64xf32>
    %240 = math.exp %239 : vector<16x64xf32>
    %cst_56 = arith.constant 1.000000e+00 : f32
    %241 = vector.broadcast %cst_56 : f32 to vector<16x64xf32>
    %242 = arith.addf %241, %240 : vector<16x64xf32>
    %243 = arith.divf %241, %242 : vector<16x64xf32>
    %244 = arith.mulf %235, %237 : vector<16x64xf32>
    %245 = math.tanh %244 : vector<16x64xf32>
    %246 = arith.mulf %243, %245 : vector<16x64xf32>
    %c0_57 = arith.constant 0 : index
    %c0_58 = arith.constant 0 : index
    %c0_59 = arith.constant 0 : index
    %247 = vector.load %arg17[%c0_57, %c0_58, %c0_59] : memref<2x2x16xf32, #tpu.memory_space<vmem>>, vector<1x2x16xf32>
    %248 = vector.shape_cast %247 : vector<1x2x16xf32> to vector<2x16xf32>
    %cst_60 = arith.constant dense<0.000000e+00> : vector<2x64xf32>
    %249 = tpu.matmul %248, %246, %cst_60 {dimension_numbers = #tpu.dot_dimension_numbers<[1], [0], [0], [1], [0, 0, 1, 1], [], []>} : vector<2x16xf32>, vector<16x64xf32>, vector<2x64xf32> -> vector<2x64xf32>
    %cst_61 = arith.constant dense<0.000000e+00> : vector<64x64xf32>
    %250 = tpu.matmul %229, %246, %cst_61 {dimension_numbers = #tpu.dot_dimension_numbers<[1], [0], [0], [1], [0, 0, 1, 1], [], []>} : vector<64x16xf32>, vector<16x64xf32>, vector<64x64xf32> -> vector<64x64xf32>
    %251 = arith.addf %228, %250 : vector<64x64xf32>
    %252 = vector.extract_strided_slice %251 {offsets = [0, 0], sizes = [16, 64], strides = [1, 1]} : vector<64x64xf32> to vector<16x64xf32>
    %253 = arith.negf %252 : vector<16x64xf32>
    %254 = math.exp %253 : vector<16x64xf32>
    %cst_62 = arith.constant 1.000000e+00 : f32
    %255 = vector.broadcast %cst_62 : f32 to vector<16x64xf32>
    %256 = arith.addf %255, %254 : vector<16x64xf32>
    %257 = arith.divf %255, %256 : vector<16x64xf32>
    %258 = vector.extract_strided_slice %251 {offsets = [16, 0], sizes = [16, 64], strides = [1, 1]} : vector<64x64xf32> to vector<16x64xf32>
    %259 = arith.negf %258 : vector<16x64xf32>
    %260 = math.exp %259 : vector<16x64xf32>
    %cst_63 = arith.constant 1.000000e+00 : f32
    %261 = vector.broadcast %cst_63 : f32 to vector<16x64xf32>
    %262 = arith.addf %261, %260 : vector<16x64xf32>
    %263 = arith.divf %261, %262 : vector<16x64xf32>
    %264 = vector.extract_strided_slice %251 {offsets = [32, 0], sizes = [16, 64], strides = [1, 1]} : vector<64x64xf32> to vector<16x64xf32>
    %265 = math.tanh %264 : vector<16x64xf32>
    %266 = vector.extract_strided_slice %251 {offsets = [48, 0], sizes = [16, 64], strides = [1, 1]} : vector<64x64xf32> to vector<16x64xf32>
    %267 = arith.negf %266 : vector<16x64xf32>
    %268 = math.exp %267 : vector<16x64xf32>
    %cst_64 = arith.constant 1.000000e+00 : f32
    %269 = vector.broadcast %cst_64 : f32 to vector<16x64xf32>
    %270 = arith.addf %269, %268 : vector<16x64xf32>
    %271 = arith.divf %269, %270 : vector<16x64xf32>
    %272 = arith.mulf %263, %244 : vector<16x64xf32>
    %273 = arith.mulf %257, %265 : vector<16x64xf32>
    %274 = arith.addf %272, %273 : vector<16x64xf32>
    %275 = math.tanh %274 : vector<16x64xf32>
    %276 = arith.mulf %271, %275 : vector<16x64xf32>
    %c1 = arith.constant 1 : index
    %c0_65 = arith.constant 0 : index
    %c0_66 = arith.constant 0 : index
    %277 = vector.load %arg17[%c1, %c0_65, %c0_66] : memref<2x2x16xf32, #tpu.memory_space<vmem>>, vector<1x2x16xf32>
    %278 = vector.shape_cast %277 : vector<1x2x16xf32> to vector<2x16xf32>
    %cst_67 = arith.constant dense<0.000000e+00> : vector<2x64xf32>
    %279 = tpu.matmul %278, %276, %cst_67 {dimension_numbers = #tpu.dot_dimension_numbers<[1], [0], [0], [1], [0, 0, 1, 1], [], []>} : vector<2x16xf32>, vector<16x64xf32>, vector<2x64xf32> -> vector<2x64xf32>
    %280 = arith.addf %249, %279 : vector<2x64xf32>
    %c0_68 = arith.constant 0 : index
    %281 = memref.load %arg18[%c0_68] : memref<1xf32, #tpu.memory_space<smem>>
    %282 = vector.broadcast %281 : f32 to vector<2x64xf32>
    %283 = arith.addf %280, %282 : vector<2x64xf32>
    %c0_69 = arith.constant 0 : index
    %c0_70 = arith.constant 0 : index
    %284 = vector.load %arg19[%c0_69, %c0_70] : memref<2x64xf32, #tpu.memory_space<vmem>>, vector<2x64xf32>
    tpu.vector_store %arg19[%c0_69, %c0_70], %283 {strides = array<i32>} : memref<2x64xf32, #tpu.memory_space<vmem>>, vector<2x64xf32>,
    return
  }
  func.func @transform_0(%arg0: i32) -> (i32, i32) {
    %c0_i32 = arith.constant 0 : i32
    %c0_i32_0 = arith.constant 0 : i32
    %c0_i32_1 = arith.constant 0 : i32
    return %c0_i32, %c0_i32_0 : i32, i32
  }
  func.func @transform_1(%arg0: i32) -> (i32, i32) {
    %c0_i32 = arith.constant 0 : i32
    %c0_i32_0 = arith.constant 0 : i32
    %c0_i32_1 = arith.constant 0 : i32
    return %c0_i32, %c0_i32_0 : i32, i32
  }
  func.func @transform_2(%arg0: i32) -> (i32, i32) {
    %c0_i32 = arith.constant 0 : i32
    %c0_i32_0 = arith.constant 0 : i32
    %c0_i32_1 = arith.constant 0 : i32
    return %c0_i32, %c0_i32_0 : i32, i32
  }
  func.func @transform_3(%arg0: i32) -> (i32, i32) {
    %c0_i32 = arith.constant 0 : i32
    %c0_i32_0 = arith.constant 0 : i32
    %c0_i32_1 = arith.constant 0 : i32
    return %c0_i32, %c0_i32_0 : i32, i32
  }
  func.func @transform_4(%arg0: i32) -> (i32, i32) {
    %c0_i32 = arith.constant 0 : i32
    %c0_i32_0 = arith.constant 0 : i32
    %c0_i32_1 = arith.constant 0 : i32
    return %c0_i32, %c0_i32_0 : i32, i32
  }
  func.func @transform_5(%arg0: i32) -> (i32, i32) {
    %c0_i32 = arith.constant 0 : i32
    %c0_i32_0 = arith.constant 0 : i32
    %c0_i32_1 = arith.constant 0 : i32
    return %c0_i32, %c0_i32_0 : i32, i32
  }
  func.func @transform_6(%arg0: i32) -> (i32, i32) {
    %c0_i32 = arith.constant 0 : i32
    %c0_i32_0 = arith.constant 0 : i32
    %c0_i32_1 = arith.constant 0 : i32
    return %c0_i32, %c0_i32_0 : i32, i32
  }
  func.func @transform_7(%arg0: i32) -> (i32, i32) {
    %c0_i32 = arith.constant 0 : i32
    %c0_i32_0 = arith.constant 0 : i32
    %c0_i32_1 = arith.constant 0 : i32
    return %c0_i32, %c0_i32_0 : i32, i32
  }
  func.func @transform_8(%arg0: i32) -> (i32, i32) {
    %c0_i32 = arith.constant 0 : i32
    %c0_i32_0 = arith.constant 0 : i32
    %c0_i32_1 = arith.constant 0 : i32
    return %c0_i32, %c0_i32_0 : i32, i32
  }
  func.func @transform_9(%arg0: i32) -> (i32, i32) {
    %c0_i32 = arith.constant 0 : i32
    %c0_i32_0 = arith.constant 0 : i32
    %c0_i32_1 = arith.constant 0 : i32
    return %c0_i32, %c0_i32_0 : i32, i32
  }
  func.func @transform_10(%arg0: i32) -> (i32, i32) {
    %c0_i32 = arith.constant 0 : i32
    %c0_i32_0 = arith.constant 0 : i32
    %c0_i32_1 = arith.constant 0 : i32
    return %c0_i32, %c0_i32_0 : i32, i32
  }
  func.func @transform_11(%arg0: i32) -> (i32, i32) {
    %c0_i32 = arith.constant 0 : i32
    %c0_i32_0 = arith.constant 0 : i32
    %c0_i32_1 = arith.constant 0 : i32
    return %c0_i32, %c0_i32_0 : i32, i32
  }
  func.func @transform_12(%arg0: i32) -> (i32, i32) {
    %c0_i32 = arith.constant 0 : i32
    %c0_i32_0 = arith.constant 0 : i32
    %c0_i32_1 = arith.constant 0 : i32
    return %c0_i32, %c0_i32_0 : i32, i32
  }
  func.func @transform_13(%arg0: i32) -> (i32, i32) {
    %c0_i32 = arith.constant 0 : i32
    %c0_i32_0 = arith.constant 0 : i32
    %c0_i32_1 = arith.constant 0 : i32
    return %c0_i32, %c0_i32_0 : i32, i32
  }
  func.func @transform_14(%arg0: i32) -> (i32, i32) {
    %c0_i32 = arith.constant 0 : i32
    %c0_i32_0 = arith.constant 0 : i32
    %c0_i32_1 = arith.constant 0 : i32
    return %c0_i32, %c0_i32_0 : i32, i32
  }
  func.func @transform_15(%arg0: i32) -> (i32, i32) {
    %c0_i32 = arith.constant 0 : i32
    %c0_i32_0 = arith.constant 0 : i32
    %c0_i32_1 = arith.constant 0 : i32
    return %c0_i32, %c0_i32_0 : i32, i32
  }
  func.func @transform_16(%arg0: i32) -> (i32, i32, i32) {
    %c0_i32 = arith.constant 0 : i32
    %c0_i32_0 = arith.constant 0 : i32
    %c0_i32_1 = arith.constant 0 : i32
    %c0_i32_2 = arith.constant 0 : i32
    return %c0_i32, %c0_i32_0, %c0_i32_1 : i32, i32, i32
  }
  func.func @transform_17(%arg0: i32) -> i32 {
    %c0_i32 = arith.constant 0 : i32
    %c0_i32_0 = arith.constant 0 : i32
    return %c0_i32 : i32
  }
  func.func @transform_18(%arg0: i32) -> (i32, i32) {
    %c0_i32 = arith.constant 0 : i32
    %c0_i32_0 = arith.constant 0 : i32
    %c0_i32_1 = arith.constant 0 : i32
    return %c0_i32, %c0_i32_0 : i32, i32
  }
}

</mosaic_0001>

<llo_original>
// kernel: forward.1
$region0: #{forward.1}
  #allocation0 [shape = 'u32[]', space=smem, size = 0x4, offset = 0x4, fixed_abs, tag = 'smem constant byte address 0x4 - core index']
  #allocation1 [shape = 'u32[144,128]{1,0:T(1,128)}', space=vmem, size = 0x12000, scoped, tag = 'internal scratch']
  #allocation2 [shape = 'f32[1]{0:T(128)S(6)}', space=smem, size = 0x200, scoped, tag = 'scoped memory for forward.1']
  %s0 = inlined_call_operand.vmem [shape: f32[2,64], index: 0, kind: input, shape index: {}]
  %s1 = inlined_call_operand.hbm [shape: f32[64,192], index: 1, kind: input, shape index: {}]
  %s2 = inlined_call_operand.hbm [shape: f32[192,128], index: 2, kind: input, shape index: {}]
  %s3 = inlined_call_operand.vmem [shape: f32[1,128], index: 3, kind: input, shape index: {}]
  %s4 = inlined_call_operand.vmem [shape: f32[1,128], index: 4, kind: input, shape index: {}]
  %s5 = inlined_call_operand.vmem [shape: f32[1,128], index: 5, kind: input, shape index: {}]
  %s6 = inlined_call_operand.vmem [shape: f32[64,32], index: 6, kind: input, shape index: {}]
  %s7 = inlined_call_operand.vmem [shape: f32[1,32], index: 7, kind: input, shape index: {}]
  %s8 = inlined_call_operand.vmem [shape: f32[1,32], index: 8, kind: input, shape index: {}]
  %s9 = inlined_call_operand.vmem [shape: f32[1,32], index: 9, kind: input, shape index: {}]
  %s10 = inlined_call_operand.vmem [shape: f32[16,64], index: 10, kind: input, shape index: {}]
  %s11 = inlined_call_operand.vmem [shape: f32[1,64], index: 11, kind: input, shape index: {}]
  %s12 = inlined_call_operand.vmem [shape: f32[64,512], index: 12, kind: input, shape index: {}]
  %s13 = inlined_call_operand.vmem [shape: f32[64,8], index: 13, kind: input, shape index: {}]
  %s14 = inlined_call_operand.vmem [shape: f32[64,16], index: 14, kind: input, shape index: {}]
  %s15 = inlined_call_operand.vmem [shape: f32[64,1], index: 15, kind: input, shape index: {}]
  %s16 = inlined_call_operand.vmem [shape: f32[2,2,16], index: 16, kind: input, shape index: {}]
  %s17 = inlined_call_operand.<no memory space> [shape: f32[1], index: 17, kind: input, shape index: {}]
  %s18 = inlined_call_operand.hbm [shape: f32[2,64], index: 18, kind: output, shape index: {}]
  %s19 = sld [smem:[#allocation0]]
  $region90: #{forward.1} parent=0
    _
  %s21 = ssub.s32 1, %s19
  %s22 = scalar_select 0, %s21, %s19
  %23 = sst [smem:[#allocation2]] %s17
  $region1: #{forward.1} parent=0
    #allocation3 [shape = 'u8[65536]{0}', space=vmem, size = 0x10000, scoped, tag = 'input window, operand 1, single buffered']
    #allocation4 [shape = 's32[1]{0}', space=sflag, size = 0x4, scoped, tag = 'scoped memory for forward.1']
    #allocation5 [shape = 's32[1]{0}', space=sflag, size = 0x4, scoped, tag = 'scoped memory for forward.1']
    #allocation6 [shape = 'u8[98304]{0}', space=vmem, size = 0x18000, scoped, tag = 'input window, operand 2, single buffered']
    #allocation7 [shape = 's32[1]{0}', space=sflag, size = 0x4, scoped, tag = 'scoped memory for forward.1']
    #allocation8 [shape = 'u8[1024]{0}', space=vmem, size = 0x400, scoped, tag = 'output window, operand 0, single buffered']
    %24 = vsyncpa [#allocation4], 0
    %25 = vsyncpa [#allocation7], 0
    %26 = vsyncpa [#allocation5], 0
    // Predicated region
    $region2: #{forward.1} parent=1 // pred_check
      _
    $region3: #{forward.1} parent=1 // pred_check_branch
      %28 = sbr.rel (0) target = $region5
    $region4: #{forward.1} parent=1 // pred_region
      _
    $region5: #{forward.1} parent=1 // pred_fallthru
      _
    // Predicated region
    $region6: #{forward.1} parent=1 // pred_check
      _
    $region7: #{forward.1} parent=1 // pred_check_branch
      %30 = sbr.rel (0) target = $region9
    $region8: #{forward.1} parent=1 // pred_region
      %s32 = ssub.s32 2048, 2048
      %33 = vsyncadd [#allocation4], %s32
      %s34 = sshll.u32 [#allocation3], 4
      %s35 = int_to_ptr.vmem [resolvable:$true] %s34
      %40 = dma.hbm_to_vmem [thread:$0]  %s1, 2048, %s35, [#allocation4], 256, 256, 16
    $region9: #{forward.1} parent=1 // pred_fallthru
      _
    // Predicated region
    $region10: #{forward.1} parent=1 // pred_check
      _
    $region11: #{forward.1} parent=1 // pred_check_branch
      %42 = sbr.rel (0) target = $region13
    $region12: #{forward.1} parent=1 // pred_region
      %s44 = ssub.s32 3072, 3072
      %45 = vsyncadd [#allocation7], %s44
      %s46 = sshll.u32 [#allocation6], 4
      %s47 = int_to_ptr.vmem [resolvable:$true] %s46
      %52 = dma.hbm_to_vmem [thread:$0]  %s2, 3072, %s47, [#allocation7], 128, 128, 8
    $region13: #{forward.1} parent=1 // pred_fallthru
      _
    // Predicated region
    $region14: #{forward.1} parent=1 // pred_check
      _
    $region15: #{forward.1} parent=1 // pred_check_branch
      %54 = sbr.rel (0) target = $region17
    $region16: #{forward.1} parent=1 // pred_region
      _
    $region17: #{forward.1} parent=1 // pred_fallthru
      _
    // Predicated region
    $region18: #{forward.1} parent=1 // pred_check
      _
    $region19: #{forward.1} parent=1 // pred_check_branch
      %56 = sbr.rel (0) target = $region21
    $region20: #{forward.1} parent=1 // pred_region
      _
    $region21: #{forward.1} parent=1 // pred_fallthru
      _
    // Predicated region
    $region22: #{forward.1} parent=1 // pred_check
      _
    $region23: #{forward.1} parent=1 // pred_check_branch
      %58 = sbr.rel (0) target = $region25
    $region24: #{forward.1} parent=1 // pred_region
      _
    $region25: #{forward.1} parent=1 // pred_fallthru
      _
    // Predicated region
    $region26: #{forward.1} parent=1 // pred_check
      _
    $region27: #{forward.1} parent=1 // pred_check_branch
      %60 = sbr.rel (0) target = $region29
    $region28: #{forward.1} parent=1 // pred_region
      _
    $region29: #{forward.1} parent=1 // pred_fallthru
      _
    // Predicated region
    $region30: #{forward.1} parent=1 // pred_check
      _
    $region31: #{forward.1} parent=1 // pred_check_branch
      %62 = sbr.rel (0) target = $region33
    $region32: #{forward.1} parent=1 // pred_region
      _
    $region33: #{forward.1} parent=1 // pred_fallthru
      _
    // Predicated region
    $region34: #{forward.1} parent=1 // pred_check
      _
    $region35: #{forward.1} parent=1 // pred_check_branch
      %64 = sbr.rel (0) target = $region37
    $region36: #{forward.1} parent=1 // pred_region
      _
    $region37: #{forward.1} parent=1 // pred_fallthru
      _
    // Predicated region
    $region38: #{forward.1} parent=1 // pred_check
      _
    $region39: #{forward.1} parent=1 // pred_check_branch
      %66 = sbr.rel (0) target = $region41
    $region40: #{forward.1} parent=1 // pred_region
      _
    $region41: #{forward.1} parent=1 // pred_fallthru
      _
    // Predicated region
    $region42: #{forward.1} parent=1 // pred_check
      _
    $region43: #{forward.1} parent=1 // pred_check_branch
      %68 = sbr.rel (0) target = $region45
    $region44: #{forward.1} parent=1 // pred_region
      _
    $region45: #{forward.1} parent=1 // pred_fallthru
      _
    // Predicated region
    $region46: #{forward.1} parent=1 // pred_check
      _
    $region47: #{forward.1} parent=1 // pred_check_branch
      %70 = sbr.rel (0) target = $region49
    $region48: #{forward.1} parent=1 // pred_region
      _
    $region49: #{forward.1} parent=1 // pred_fallthru
      _
    // Predicated region
    $region50: #{forward.1} parent=1 // pred_check
      _
    $region51: #{forward.1} parent=1 // pred_check_branch
      %72 = sbr.rel (0) target = $region53
    $region52: #{forward.1} parent=1 // pred_region
      _
    $region53: #{forward.1} parent=1 // pred_fallthru
      _
    // Predicated region
    $region54: #{forward.1} parent=1 // pred_check
      _
    $region55: #{forward.1} parent=1 // pred_check_branch
      %74 = sbr.rel (0) target = $region57
    $region56: #{forward.1} parent=1 // pred_region
      _
    $region57: #{forward.1} parent=1 // pred_fallthru
      _
    // Predicated region
    $region58: #{forward.1} parent=1 // pred_check
      _
    $region59: #{forward.1} parent=1 // pred_check_branch
      %76 = sbr.rel (0) target = $region61
    $region60: #{forward.1} parent=1 // pred_region
      _
    $region61: #{forward.1} parent=1 // pred_fallthru
      _
    // Predicated region
    $region62: #{forward.1} parent=1 // pred_check
      _
    $region63: #{forward.1} parent=1 // pred_check_branch
      %78 = sbr.rel (0) target = $region65
    $region64: #{forward.1} parent=1 // pred_region
      _
    $region65: #{forward.1} parent=1 // pred_fallthru
      _
    // Predicated region
    $region66: #{forward.1} parent=1 // pred_check
      _
    $region67: #{forward.1} parent=1 // pred_check_branch
      %80 = sbr.rel (0) target = $region69
    $region68: #{forward.1} parent=1 // pred_region
      _
    $region69: #{forward.1} parent=1 // pred_fallthru
      _
    // Predicated region
    $region70: #{forward.1} parent=1 // pred_check
      _
    $region71: #{forward.1} parent=1 // pred_check_branch
      %82 = sbr.rel (0) target = $region73
    $region72: #{forward.1} parent=1 // pred_region
      _
    $region73: #{forward.1} parent=1 // pred_fallthru
      _
    // Predicated region
    $region74: #{forward.1} parent=1 // pred_check
      _
    $region75: #{forward.1} parent=1 // pred_check_branch
      %84 = sbr.rel (0) target = $region77
    $region76: #{forward.1} parent=1 // pred_region
      %85 = dma.done [#allocation4], 2048
    $region77: #{forward.1} parent=1 // pred_fallthru
      _
    // Predicated region
    $region78: #{forward.1} parent=1 // pred_check
      _
    $region79: #{forward.1} parent=1 // pred_check_branch
      %87 = sbr.rel (0) target = $region81
    $region80: #{forward.1} parent=1 // pred_region
      %88 = dma.done [#allocation7], 3072
    $region81: #{forward.1} parent=1 // pred_fallthru
      _
    %v89 = vld [vmem:[%s0] sm:$0x3]
    %v90 = vld [vmem:[#allocation3] sm:$0xff]
    %v91 = vld [vmem:[#allocation3 + $0x8] sm:$0xff]
    %v92 = vld [vmem:[#allocation3 + $0x10] sm:$0xff]
    %v93 = vld [vmem:[#allocation3 + $0x18] sm:$0xff]
    %v94 = vld [vmem:[#allocation3 + $0x20] sm:$0xff]
    %v95 = vld [vmem:[#allocation3 + $0x28] sm:$0xff]
    %v96 = vld [vmem:[#allocation3 + $0x30] sm:$0xff]
    %v97 = vld [vmem:[#allocation3 + $0x38] sm:$0xff]
    %v98 = vld [vmem:[#allocation3 + $0x40] sm:$0xff]
    %v99 = vld [vmem:[#allocation3 + $0x48] sm:$0xff]
    %v100 = vld [vmem:[#allocation3 + $0x50] sm:$0xff]
    %v101 = vld [vmem:[#allocation3 + $0x58] sm:$0xff]
    %v102 = vld [vmem:[#allocation3 + $0x60] sm:$0xff]
    %v103 = vld [vmem:[#allocation3 + $0x68] sm:$0xff]
    %v104 = vld [vmem:[#allocation3 + $0x70] sm:$0xff]
    %v105 = vld [vmem:[#allocation3 + $0x78] sm:$0xff]
    %vm106 = vcmask 523264
    %v108 = vsel %vm106, %v89, 0
    %110 = vmatprep.subr.mxu0 %v91
    %111 = vmatpush1.msra.mxu0 %v90
    %112 = vmatprep.subr.mxu0 %v93
    %113 = vmatpush1.msra.mxu0 %v92
    %114 = vmatprep.subr.mxu0 %v95
    %115 = vmatpush1.msra.mxu0 %v94
    %116 = vmatprep.subr.mxu0 %v97
    %117 = vmatpush1.msra.mxu0 %v96
    %118 = vmatprep.subr.mxu0 %v99
    %119 = vmatpush1.msra.mxu0 %v98
    %120 = vmatprep.subr.mxu0 %v101
    %121 = vmatpush1.msra.mxu0 %v100
    %122 = vmatprep.subr.mxu0 %v103
    %123 = vmatpush1.msra.mxu0 %v102
    %124 = vmatprep.subr.mxu0 %v105
    %125 = vmatpush1.msra.mxu0 %v104
    %126 = vmatprep.subr.mxu0 0.0
    %127 = vmatpush1.msra.mxu0 0.0
    %128 = vmatprep.subr.mxu0 0.0
    %129 = vmatpush1.msra.mxu0 0.0
    %130 = vmatprep.subr.mxu0 0.0
    %131 = vmatpush1.msra.mxu0 0.0
    %132 = vmatprep.subr.mxu0 0.0
    %133 = vmatpush1.msra.mxu0 0.0
    %134 = vmatprep.subr.mxu0 0.0
    %135 = vmatpush1.msra.mxu0 0.0
    %136 = vmatprep.subr.mxu0 0.0
    %137 = vmatpush1.msra.mxu0 0.0
    %138 = vmatprep.subr.mxu0 0.0
    %139 = vmatpush1.msra.mxu0 0.0
    %140 = vmatprep.subr.mxu0 0.0
    %141 = vmatpush1.msra.mxu0 0.0
    %142 = vmatprep.subr.mxu0 0.0
    %143 = vmatpush1.msra.mxu0 0.0
    %144 = vmatprep.subr.mxu0 0.0
    %145 = vmatpush1.msra.mxu0 0.0
    %146 = vmatprep.subr.mxu0 0.0
    %147 = vmatpush1.msra.mxu0 0.0
    %148 = vmatprep.subr.mxu0 0.0
    %149 = vmatpush1.msra.mxu0 0.0
    %150 = vmatprep.subr.mxu0 0.0
    %151 = vmatpush1.msra.mxu0 0.0
    %152 = vmatprep.subr.mxu0 0.0
    %153 = vmatpush1.msra.mxu0 0.0
    %154 = vmatprep.subr.mxu0 0.0
    %155 = vmatpush1.msra.mxu0 0.0
    %156 = vmatprep.subr.mxu0 0.0
    %157 = vmatpush1.msra.mxu0 0.0
    %158 = vmatprep.subr.mxu0 0.0
    %159 = vmatpush1.msra.mxu0 0.0
    %160 = vmatprep.subr.mxu0 0.0
    %161 = vmatpush1.msra.mxu0 0.0
    %162 = vmatprep.subr.mxu0 0.0
    %163 = vmatpush1.msra.mxu0 0.0
    %164 = vmatprep.subr.mxu0 0.0
    %165 = vmatpush1.msra.mxu0 0.0
    %166 = vmatprep.subr.mxu0 0.0
    %167 = vmatpush1.msra.mxu0 0.0
    %168 = vmatprep.subr.mxu0 0.0
    %169 = vmatpush1.msra.mxu0 0.0
    %170 = vmatprep.subr.mxu0 0.0
    %171 = vmatpush1.msra.mxu0 0.0
    %172 = vmatprep.subr.mxu0 0.0
    %173 = vmatpush1.msra.mxu0 0.0
    %174 = vmatprep.mubr.f32.mxu0 0.0
    %175 = vmatmul.mubr.f32.gmra.mrb[0].mxu0 %v108
    %v176 = vpop.f32.mrb[0].mxu0
    %v177 = vadd.f32 0.0, %v176
    %v178 = vpop.f32.mrb[0].mxu0
    %v179 = vadd.f32 0.0, %v178
    %180 = vdwg.mxu0
    %v181 = vmul.f32 %v177, %v177
    %183 = vrot.lane.b32.xlu0 %v181, 64
    %v184 = vpop.permute.xlu0 %183
    %v186 = vadd.f32 %v181, %v184
    %v187 = vmul.f32 %v179, %v179
    %v188 = vadd.f32 %v186, %v187
    %v189 = vmul.f32 %v188, 0.33333334
    %v190 = vadd.f32 %v189, 1e-05
    %v191 = vrsqrt.pop %v190
    %v192 = vmul.f32 %v177, %v191
    %194 = vrot.lane.b32.xlu0 %v191, 64
    %v195 = vpop.permute.xlu0 %194
    %v197 = vmul.f32 %v177, %v195
    %v198 = vmul.f32 %v179, %v191
    %v199 = vsel %vm106, %v192, %v197
    %v200 = vld [vmem:[#allocation6] sm:$0xff]
    %v201 = vld [vmem:[#allocation6 + $0x8] sm:$0xff]
    %v202 = vld [vmem:[#allocation6 + $0x10] sm:$0xff]
    %v203 = vld [vmem:[#allocation6 + $0x18] sm:$0xff]
    %v204 = vld [vmem:[#allocation6 + $0x20] sm:$0xff]
    %v205 = vld [vmem:[#allocation6 + $0x28] sm:$0xff]
    %v206 = vld [vmem:[#allocation6 + $0x30] sm:$0xff]
    %v207 = vld [vmem:[#allocation6 + $0x38] sm:$0xff]
    %v208 = vld [vmem:[#allocation6 + $0x40] sm:$0xff]
    %v209 = vld [vmem:[#allocation6 + $0x48] sm:$0xff]
    %v210 = vld [vmem:[#allocation6 + $0x50] sm:$0xff]
    %v211 = vld [vmem:[#allocation6 + $0x58] sm:$0xff]
    %v212 = vld [vmem:[#allocation6 + $0x60] sm:$0xff]
    %v213 = vld [vmem:[#allocation6 + $0x68] sm:$0xff]
    %v214 = vld [vmem:[#allocation6 + $0x70] sm:$0xff]
    %v215 = vld [vmem:[#allocation6 + $0x78] sm:$0xff]
    %v216 = vld [vmem:[#allocation6 + $0x80] sm:$0xff]
    %v217 = vld [vmem:[#allocation6 + $0x88] sm:$0xff]
    %v218 = vld [vmem:[#allocation6 + $0x90] sm:$0xff]
    %v219 = vld [vmem:[#allocation6 + $0x98] sm:$0xff]
    %v220 = vld [vmem:[#allocation6 + $0xa0] sm:$0xff]
    %v221 = vld [vmem:[#allocation6 + $0xa8] sm:$0xff]
    %v222 = vld [vmem:[#allocation6 + $0xb0] sm:$0xff]
    %v223 = vld [vmem:[#allocation6 + $0xb8] sm:$0xff]
    %v224 = vld [vmem:[%s3] sm:$0x1]
    %v226 = vlaneseq
    %v227 = vshrl.u32 %v226, 7
    %v228 = vsub.s32 0, %v227
    %v229 = vrot.slane %v224, %v228
    %v232 = vsel %vm106, %v198, 0
    %234 = vmatprep.subr.mxu0 0.0
    %235 = vmatpush1.msra.mxu0 %v200
    %236 = vmatprep.subr.mxu0 0.0
    %237 = vmatpush1.msra.mxu0 %v201
    %238 = vmatprep.subr.mxu0 0.0
    %239 = vmatpush1.msra.mxu0 %v202
    %240 = vmatprep.subr.mxu0 0.0
    %241 = vmatpush1.msra.mxu0 %v203
    %242 = vmatprep.subr.mxu0 0.0
    %243 = vmatpush1.msra.mxu0 %v204
    %244 = vmatprep.subr.mxu0 0.0
    %245 = vmatpush1.msra.mxu0 %v205
    %246 = vmatprep.subr.mxu0 0.0
    %247 = vmatpush1.msra.mxu0 %v206
    %248 = vmatprep.subr.mxu0 0.0
    %249 = vmatpush1.msra.mxu0 %v207
    %250 = vmatprep.subr.mxu0 0.0
    %251 = vmatpush1.msra.mxu0 %v208
    %252 = vmatprep.subr.mxu0 0.0
    %253 = vmatpush1.msra.mxu0 %v209
    %254 = vmatprep.subr.mxu0 0.0
    %255 = vmatpush1.msra.mxu0 %v210
    %256 = vmatprep.subr.mxu0 0.0
    %257 = vmatpush1.msra.mxu0 %v211
    %258 = vmatprep.subr.mxu0 0.0
    %259 = vmatpush1.msra.mxu0 %v212
    %260 = vmatprep.subr.mxu0 0.0
    %261 = vmatpush1.msra.mxu0 %v213
    %262 = vmatprep.subr.mxu0 0.0
    %263 = vmatpush1.msra.mxu0 %v214
    %264 = vmatprep.subr.mxu0 0.0
    %265 = vmatpush1.msra.mxu0 %v215
    %266 = vmatprep.subr.mxu0 0.0
    %267 = vmatpush1.msra.mxu0 %v216
    %268 = vmatprep.subr.mxu0 0.0
    %269 = vmatpush1.msra.mxu0 %v217
    %270 = vmatprep.subr.mxu0 0.0
    %271 = vmatpush1.msra.mxu0 %v218
    %272 = vmatprep.subr.mxu0 0.0
    %273 = vmatpush1.msra.mxu0 %v219
    %274 = vmatprep.subr.mxu0 0.0
    %275 = vmatpush1.msra.mxu0 %v220
    %276 = vmatprep.subr.mxu0 0.0
    %277 = vmatpush1.msra.mxu0 %v221
    %278 = vmatprep.subr.mxu0 0.0
    %279 = vmatpush1.msra.mxu0 %v222
    %280 = vmatprep.subr.mxu0 0.0
    %281 = vmatpush1.msra.mxu0 %v223
    %282 = vmatprep.subr.mxu0 0.0
    %283 = vmatpush1.msra.mxu0 0.0
    %284 = vmatprep.subr.mxu0 0.0
    %285 = vmatpush1.msra.mxu0 0.0
    %286 = vmatprep.subr.mxu0 0.0
    %287 = vmatpush1.msra.mxu0 0.0
    %288 = vmatprep.subr.mxu0 0.0
    %289 = vmatpush1.msra.mxu0 0.0
    %290 = vmatprep.subr.mxu0 0.0
    %291 = vmatpush1.msra.mxu0 0.0
    %292 = vmatprep.subr.mxu0 0.0
    %293 = vmatpush1.msra.mxu0 0.0
    %294 = vmatprep.subr.mxu0 0.0
    %295 = vmatpush1.msra.mxu0 0.0
    %296 = vmatprep.subr.mxu0 0.0
    %297 = vmatpush1.msra.mxu0 0.0
    %298 = vmatprep.mubr.f32.mxu0 %v232
    %299 = vmatmul.mubr.f32.gmra.mrb[0].mxu0 %v199
    %v300 = vpop.f32.mrb[0].mxu0
    %v301 = vadd.f32 %v229, %v300
    %v302 = vpop.f32.mrb[0].mxu0
    %303 = vdwg.mxu0
    %v304 = vmax.f32 %v301, 0.0
    %v305 = vld [vmem:[%s4] sm:$0x1]
    %v307 = vlaneseq
    %v308 = vshrl.u32 %v307, 7
    %v309 = vsub.s32 0, %v308
    %v310 = vrot.slane %v305, %v309
    %v312 = vmul.f32 %v304, %v310
    %v313 = vld [vmem:[%s5] sm:$0x1]
    %v315 = vlaneseq
    %v316 = vshrl.u32 %v315, 7
    %v317 = vsub.s32 0, %v316
    %v318 = vrot.slane %v313, %v317
    %v320 = vadd.f32 %v312, %v318
    %v321 = vlaneseq
    %v322 = vand.u32 %v321, 127
    %vm323 = vcmp.lt.s32.totalorder %v322, 0
    %v324 = vsub.s32 0, %v322
    %v325 = vsel %vm323, %v324, %v322
    %v326 = vshrl.u32 %v325, 3
    %v327 = vand.u32 %v325, 7
    %v328 = vsub.s32 0, %v327
    %v329 = vsel %vm323, %v328, %v327
    %vm330 = vcmp.ne.s32.totalorder %v329, 0
    %vm331 = vcmp.lt.s32.totalorder %v329, 0
    %vm332 = vmand %vm331, %vm330
    %v333 = vadd.s32 %v329, 8
    %v334 = vsel %vm332, %v333, %v329
    %vm335 = vcmp.ge.s32.totalorder %v334, 1
    %v336 = vsel %vm335, %v320, -inf
    %vm337 = vcmp.le.s32.totalorder %v334, 6
    %339 = vrot.lane.b32.xlu0 %v320, 64
    %v340 = vpop.permute.xlu0 %339
    %v342 = vsel %vm337, %v340, -inf
    %v343 = vmax.f32 %v336, %v342
    %v344 = vld [vmem:[%s6] sm:$0xff]
    %v345 = vld [vmem:[%s6 + $0x8] sm:$0xff]
    %v346 = vld [vmem:[%s6 + $0x10] sm:$0xff]
    %v347 = vld [vmem:[%s6 + $0x18] sm:$0xff]
    %v348 = vld [vmem:[%s6 + $0x20] sm:$0xff]
    %v349 = vld [vmem:[%s6 + $0x28] sm:$0xff]
    %v350 = vld [vmem:[%s6 + $0x30] sm:$0xff]
    %v351 = vld [vmem:[%s6 + $0x38] sm:$0xff]
    %v352 = vld [vmem:[%s7] sm:$0x1]
    %v354 = vlaneseq
    %v355 = vshrl.u32 %v354, 7
    %v356 = vsub.s32 0, %v355
    %v357 = vrot.slane %v352, %v356
    %v360 = vsel %vm106, %v343, 0
    %362 = vmatprep.subr.mxu0 0.0
    %363 = vmatpush1.msra.mxu0 %v344
    %364 = vmatprep.subr.mxu0 0.0
    %365 = vmatpush1.msra.mxu0 %v345
    %366 = vmatprep.subr.mxu0 0.0
    %367 = vmatpush1.msra.mxu0 %v346
    %368 = vmatprep.subr.mxu0 0.0
    %369 = vmatpush1.msra.mxu0 %v347
    %370 = vmatprep.subr.mxu0 0.0
    %371 = vmatpush1.msra.mxu0 %v348
    %372 = vmatprep.subr.mxu0 0.0
    %373 = vmatpush1.msra.mxu0 %v349
    %374 = vmatprep.subr.mxu0 0.0
    %375 = vmatpush1.msra.mxu0 %v350
    %376 = vmatprep.subr.mxu0 0.0
    %377 = vmatpush1.msra.mxu0 %v351
    %378 = vmatprep.subr.mxu0 0.0
    %379 = vmatpush1.msra.mxu0 0.0
    %380 = vmatprep.subr.mxu0 0.0
    %381 = vmatpush1.msra.mxu0 0.0
    %382 = vmatprep.subr.mxu0 0.0
    %383 = vmatpush1.msra.mxu0 0.0
    %384 = vmatprep.subr.mxu0 0.0
    %385 = vmatpush1.msra.mxu0 0.0
    %386 = vmatprep.subr.mxu0 0.0
    %387 = vmatpush1.msra.mxu0 0.0
    %388 = vmatprep.subr.mxu0 0.0
    %389 = vmatpush1.msra.mxu0 0.0
    %390 = vmatprep.subr.mxu0 0.0
    %391 = vmatpush1.msra.mxu0 0.0
    %392 = vmatprep.subr.mxu0 0.0
    %393 = vmatpush1.msra.mxu0 0.0
    %394 = vmatprep.subr.mxu0 0.0
    %395 = vmatpush1.msra.mxu0 0.0
    %396 = vmatprep.subr.mxu0 0.0
    %397 = vmatpush1.msra.mxu0 0.0
    %398 = vmatprep.subr.mxu0 0.0
    %399 = vmatpush1.msra.mxu0 0.0
    %400 = vmatprep.subr.mxu0 0.0
    %401 = vmatpush1.msra.mxu0 0.0
    %402 = vmatprep.subr.mxu0 0.0
    %403 = vmatpush1.msra.mxu0 0.0
    %404 = vmatprep.subr.mxu0 0.0
    %405 = vmatpush1.msra.mxu0 0.0
    %406 = vmatprep.subr.mxu0 0.0
    %407 = vmatpush1.msra.mxu0 0.0
    %408 = vmatprep.subr.mxu0 0.0
    %409 = vmatpush1.msra.mxu0 0.0
    %410 = vmatprep.subr.mxu0 0.0
    %411 = vmatpush1.msra.mxu0 0.0
    %412 = vmatprep.subr.mxu0 0.0
    %413 = vmatpush1.msra.mxu0 0.0
    %414 = vmatprep.subr.mxu0 0.0
    %415 = vmatpush1.msra.mxu0 0.0
    %416 = vmatprep.subr.mxu0 0.0
    %417 = vmatpush1.msra.mxu0 0.0
    %418 = vmatprep.subr.mxu0 0.0
    %419 = vmatpush1.msra.mxu0 0.0
    %420 = vmatprep.subr.mxu0 0.0
    %421 = vmatpush1.msra.mxu0 0.0
    %422 = vmatprep.subr.mxu0 0.0
    %423 = vmatpush1.msra.mxu0 0.0
    %424 = vmatprep.subr.mxu0 0.0
    %425 = vmatpush1.msra.mxu0 0.0
    %426 = vmatprep.mubr.f32.mxu0 0.0
    %427 = vmatmul.mubr.f32.gmra.mrb[0].mxu0 %v360
    %v428 = vpop.f32.mrb[0].mxu0
    %v429 = vadd.f32 %v357, %v428
    %v430 = vpop.f32.mrb[0].mxu0
    %431 = vdwg.mxu0
    %v432 = vmax.f32 %v429, 0.0
    %v433 = vld [vmem:[%s8] sm:$0x1]
    %v435 = vlaneseq
    %v436 = vshrl.u32 %v435, 7
    %v437 = vsub.s32 0, %v436
    %v438 = vrot.slane %v433, %v437
    %v440 = vmul.f32 %v432, %v438
    %v441 = vld [vmem:[%s9] sm:$0x1]
    %v443 = vlaneseq
    %v444 = vshrl.u32 %v443, 7
    %v445 = vsub.s32 0, %v444
    %v446 = vrot.slane %v441, %v445
    %v448 = vadd.f32 %v440, %v446
    %vm449 = vcmp.lt.s32.totalorder %v322, 0
    %v450 = vsub.s32 0, %v322
    %v451 = vsel %vm449, %v450, %v322
    %v452 = vshrl.u32 %v451, 1
    %v453 = vand.u32 %v451, 1
    %v454 = vsub.s32 0, %v453
    %v455 = vsel %vm449, %v454, %v453
    %vm456 = vcmp.ne.s32.totalorder %v455, 0
    %vm457 = vcmp.lt.s32.totalorder %v455, 0
    %vm458 = vmand %vm457, %vm456
    %v459 = vadd.s32 %v455, 2
    %v460 = vsel %vm458, %v459, %v455
    %vm461 = vcmp.ge.s32.totalorder %v460, 1
    %v462 = vsel %vm461, %v448, -inf
    %vm463 = vcmp.le.s32.totalorder %v460, 0
    %465 = vrot.lane.b32.xlu0 %v448, 112
    %v466 = vpop.permute.xlu0 %465
    %v468 = vsel %vm463, %v466, -inf
    %v469 = vmax.f32 %v462, %v468
    %v470 = vld [vmem:[%s10] sm:$0xff]
    %v471 = vld [vmem:[%s10 + $0x8] sm:$0xff]
    %v472 = vld [vmem:[%s11] sm:$0x1]
    %v474 = vlaneseq
    %v475 = vshrl.u32 %v474, 7
    %v476 = vsub.s32 0, %v475
    %v477 = vrot.slane %v472, %v476
    %vm479 = vcmask 130048
    %v481 = vsel %vm479, %v469, 0
    %483 = vmatprep.subr.mxu0 0.0
    %484 = vmatpush1.msra.mxu0 %v470
    %485 = vmatprep.subr.mxu0 0.0
    %486 = vmatpush1.msra.mxu0 %v471
    %487 = vmatprep.subr.mxu0 0.0
    %488 = vmatpush1.msra.mxu0 0.0
    %489 = vmatprep.subr.mxu0 0.0
    %490 = vmatpush1.msra.mxu0 0.0
    %491 = vmatprep.subr.mxu0 0.0
    %492 = vmatpush1.msra.mxu0 0.0
    %493 = vmatprep.subr.mxu0 0.0
    %494 = vmatpush1.msra.mxu0 0.0
    %495 = vmatprep.subr.mxu0 0.0
    %496 = vmatpush1.msra.mxu0 0.0
    %497 = vmatprep.subr.mxu0 0.0
    %498 = vmatpush1.msra.mxu0 0.0
    %499 = vmatprep.subr.mxu0 0.0
    %500 = vmatpush1.msra.mxu0 0.0
    %501 = vmatprep.subr.mxu0 0.0
    %502 = vmatpush1.msra.mxu0 0.0
    %503 = vmatprep.subr.mxu0 0.0
    %504 = vmatpush1.msra.mxu0 0.0
    %505 = vmatprep.subr.mxu0 0.0
    %506 = vmatpush1.msra.mxu0 0.0
    %507 = vmatprep.subr.mxu0 0.0
    %508 = vmatpush1.msra.mxu0 0.0
    %509 = vmatprep.subr.mxu0 0.0
    %510 = vmatpush1.msra.mxu0 0.0
    %511 = vmatprep.subr.mxu0 0.0
    %512 = vmatpush1.msra.mxu0 0.0
    %513 = vmatprep.subr.mxu0 0.0
    %514 = vmatpush1.msra.mxu0 0.0
    %515 = vmatprep.subr.mxu0 0.0
    %516 = vmatpush1.msra.mxu0 0.0
    %517 = vmatprep.subr.mxu0 0.0
    %518 = vmatpush1.msra.mxu0 0.0
    %519 = vmatprep.subr.mxu0 0.0
    %520 = vmatpush1.msra.mxu0 0.0
    %521 = vmatprep.subr.mxu0 0.0
    %522 = vmatpush1.msra.mxu0 0.0
    %523 = vmatprep.subr.mxu0 0.0
    %524 = vmatpush1.msra.mxu0 0.0
    %525 = vmatprep.subr.mxu0 0.0
    %526 = vmatpush1.msra.mxu0 0.0
    %527 = vmatprep.subr.mxu0 0.0
    %528 = vmatpush1.msra.mxu0 0.0
    %529 = vmatprep.subr.mxu0 0.0
    %530 = vmatpush1.msra.mxu0 0.0
    %531 = vmatprep.subr.mxu0 0.0
    %532 = vmatpush1.msra.mxu0 0.0
    %533 = vmatprep.subr.mxu0 0.0
    %534 = vmatpush1.msra.mxu0 0.0
    %535 = vmatprep.subr.mxu0 0.0
    %536 = vmatpush1.msra.mxu0 0.0
    %537 = vmatprep.subr.mxu0 0.0
    %538 = vmatpush1.msra.mxu0 0.0
    %539 = vmatprep.subr.mxu0 0.0
    %540 = vmatpush1.msra.mxu0 0.0
    %541 = vmatprep.subr.mxu0 0.0
    %542 = vmatpush1.msra.mxu0 0.0
    %543 = vmatprep.subr.mxu0 0.0
    %544 = vmatpush1.msra.mxu0 0.0
    %545 = vmatprep.subr.mxu0 0.0
    %546 = vmatpush1.msra.mxu0 0.0
    %547 = vmatprep.mubr.f32.mxu0 0.0
    %548 = vmatmul.mubr.f32.gmra.mrb[0].mxu0 %v481
    %v549 = vpop.f32.mrb[0].mxu0
    %v550 = vadd.f32 %v477, %v549
    %v551 = vpop.f32.mrb[0].mxu0
    %552 = vdwg.mxu0
    %v553 = vmax.f32 %v550, 0.0
    %v554 = vld [vmem:[%s12] sm:$0xff]
    %v555 = vld [vmem:[%s12 + $0x8] sm:$0xff]
    %v556 = vld [vmem:[%s12 + $0x10] sm:$0xff]
    %v557 = vld [vmem:[%s12 + $0x18] sm:$0xff]
    %v558 = vld [vmem:[%s12 + $0x20] sm:$0xff]
    %v559 = vld [vmem:[%s12 + $0x28] sm:$0xff]
    %v560 = vld [vmem:[%s12 + $0x30] sm:$0xff]
    %v561 = vld [vmem:[%s12 + $0x38] sm:$0xff]
    %v562 = vld [vmem:[%s12 + $0x40] sm:$0xff]
    %v563 = vld [vmem:[%s12 + $0x48] sm:$0xff]
    %v564 = vld [vmem:[%s12 + $0x50] sm:$0xff]
    %v565 = vld [vmem:[%s12 + $0x58] sm:$0xff]
    %v566 = vld [vmem:[%s12 + $0x60] sm:$0xff]
    %v567 = vld [vmem:[%s12 + $0x68] sm:$0xff]
    %v568 = vld [vmem:[%s12 + $0x70] sm:$0xff]
    %v569 = vld [vmem:[%s12 + $0x78] sm:$0xff]
    %v570 = vld [vmem:[%s12 + $0x80] sm:$0xff]
    %v571 = vld [vmem:[%s12 + $0x88] sm:$0xff]
    %v572 = vld [vmem:[%s12 + $0x90] sm:$0xff]
    %v573 = vld [vmem:[%s12 + $0x98] sm:$0xff]
    %v574 = vld [vmem:[%s12 + $0xa0] sm:$0xff]
    %v575 = vld [vmem:[%s12 + $0xa8] sm:$0xff]
    %v576 = vld [vmem:[%s12 + $0xb0] sm:$0xff]
    %v577 = vld [vmem:[%s12 + $0xb8] sm:$0xff]
    %v578 = vld [vmem:[%s12 + $0xc0] sm:$0xff]
    %v579 = vld [vmem:[%s12 + $0xc8] sm:$0xff]
    %v580 = vld [vmem:[%s12 + $0xd0] sm:$0xff]
    %v581 = vld [vmem:[%s12 + $0xd8] sm:$0xff]
    %v582 = vld [vmem:[%s12 + $0xe0] sm:$0xff]
    %v583 = vld [vmem:[%s12 + $0xe8] sm:$0xff]
    %v584 = vld [vmem:[%s12 + $0xf0] sm:$0xff]
    %v585 = vld [vmem:[%s12 + $0xf8] sm:$0xff]
    %v587 = vsel %vm106, %v553, 0
    %589 = vmatprep.subr.mxu0 %v555
    %590 = vmatpush1.msra.mxu0 %v554
    %591 = vmatprep.subr.mxu0 %v559
    %592 = vmatpush1.msra.mxu0 %v558
    %593 = vmatprep.subr.mxu0 %v563
    %594 = vmatpush1.msra.mxu0 %v562
    %595 = vmatprep.subr.mxu0 %v567
    %596 = vmatpush1.msra.mxu0 %v566
    %597 = vmatprep.subr.mxu0 %v571
    %598 = vmatpush1.msra.mxu0 %v570
    %599 = vmatprep.subr.mxu0 %v575
    %600 = vmatpush1.msra.mxu0 %v574
    %601 = vmatprep.subr.mxu0 %v579
    %602 = vmatpush1.msra.mxu0 %v578
    %603 = vmatprep.subr.mxu0 %v583
    %604 = vmatpush1.msra.mxu0 %v582
    %605 = vmatprep.subr.mxu0 0.0
    %606 = vmatpush1.msra.mxu0 0.0
    %607 = vmatprep.subr.mxu0 0.0
    %608 = vmatpush1.msra.mxu0 0.0
    %609 = vmatprep.subr.mxu0 0.0
    %610 = vmatpush1.msra.mxu0 0.0
    %611 = vmatprep.subr.mxu0 0.0
    %612 = vmatpush1.msra.mxu0 0.0
    %613 = vmatprep.subr.mxu0 0.0
    %614 = vmatpush1.msra.mxu0 0.0
    %615 = vmatprep.subr.mxu0 0.0
    %616 = vmatpush1.msra.mxu0 0.0
    %617 = vmatprep.subr.mxu0 0.0
    %618 = vmatpush1.msra.mxu0 0.0
    %619 = vmatprep.subr.mxu0 0.0
    %620 = vmatpush1.msra.mxu0 0.0
    %621 = vmatprep.subr.mxu0 0.0
    %622 = vmatpush1.msra.mxu0 0.0
    %623 = vmatprep.subr.mxu0 0.0
    %624 = vmatpush1.msra.mxu0 0.0
    %625 = vmatprep.subr.mxu0 0.0
    %626 = vmatpush1.msra.mxu0 0.0
    %627 = vmatprep.subr.mxu0 0.0
    %628 = vmatpush1.msra.mxu0 0.0
    %629 = vmatprep.subr.mxu0 0.0
    %630 = vmatpush1.msra.mxu0 0.0
    %631 = vmatprep.subr.mxu0 0.0
    %632 = vmatpush1.msra.mxu0 0.0
    %633 = vmatprep.subr.mxu0 0.0
    %634 = vmatpush1.msra.mxu0 0.0
    %635 = vmatprep.subr.mxu0 0.0
    %636 = vmatpush1.msra.mxu0 0.0
    %637 = vmatprep.subr.mxu0 0.0
    %638 = vmatpush1.msra.mxu0 0.0
    %639 = vmatprep.subr.mxu0 0.0
    %640 = vmatpush1.msra.mxu0 0.0
    %641 = vmatprep.subr.mxu0 0.0
    %642 = vmatpush1.msra.mxu0 0.0
    %643 = vmatprep.subr.mxu0 0.0
    %644 = vmatpush1.msra.mxu0 0.0
    %645 = vmatprep.subr.mxu0 0.0
    %646 = vmatpush1.msra.mxu0 0.0
    %647 = vmatprep.subr.mxu0 0.0
    %648 = vmatpush1.msra.mxu0 0.0
    %649 = vmatprep.subr.mxu0 0.0
    %650 = vmatpush1.msra.mxu0 0.0
    %651 = vmatprep.subr.mxu0 0.0
    %652 = vmatpush1.msra.mxu0 0.0
    %653 = vmatprep.mubr.f32.mxu0 0.0
    %654 = vmatmul.mubr.f32.gmra.mrb[0].mxu0 %v587
    %v655 = vpop.f32.mrb[0].mxu0
    %v656 = vadd.f32 0.0, %v655
    %v657 = vpop.f32.mrb[0].mxu0
    %v658 = vadd.f32 0.0, %v657
    %659 = vdwg.mxu0
    %660 = vmatprep.subr.mxu0 %v557
    %661 = vmatpush1.msra.mxu0 %v556
    %662 = vmatprep.subr.mxu0 %v561
    %663 = vmatpush1.msra.mxu0 %v560
    %664 = vmatprep.subr.mxu0 %v565
    %665 = vmatpush1.msra.mxu0 %v564
    %666 = vmatprep.subr.mxu0 %v569
    %667 = vmatpush1.msra.mxu0 %v568
    %668 = vmatprep.subr.mxu0 %v573
    %669 = vmatpush1.msra.mxu0 %v572
    %670 = vmatprep.subr.mxu0 %v577
    %671 = vmatpush1.msra.mxu0 %v576
    %672 = vmatprep.subr.mxu0 %v581
    %673 = vmatpush1.msra.mxu0 %v580
    %674 = vmatprep.subr.mxu0 %v585
    %675 = vmatpush1.msra.mxu0 %v584
    %676 = vmatprep.subr.mxu0 0.0
    %677 = vmatpush1.msra.mxu0 0.0
    %678 = vmatprep.subr.mxu0 0.0
    %679 = vmatpush1.msra.mxu0 0.0
    %680 = vmatprep.subr.mxu0 0.0
    %681 = vmatpush1.msra.mxu0 0.0
    %682 = vmatprep.subr.mxu0 0.0
    %683 = vmatpush1.msra.mxu0 0.0
    %684 = vmatprep.subr.mxu0 0.0
    %685 = vmatpush1.msra.mxu0 0.0
    %686 = vmatprep.subr.mxu0 0.0
    %687 = vmatpush1.msra.mxu0 0.0
    %688 = vmatprep.subr.mxu0 0.0
    %689 = vmatpush1.msra.mxu0 0.0
    %690 = vmatprep.subr.mxu0 0.0
    %691 = vmatpush1.msra.mxu0 0.0
    %692 = vmatprep.subr.mxu0 0.0
    %693 = vmatpush1.msra.mxu0 0.0
    %694 = vmatprep.subr.mxu0 0.0
    %695 = vmatpush1.msra.mxu0 0.0
    %696 = vmatprep.subr.mxu0 0.0
    %697 = vmatpush1.msra.mxu0 0.0
    %698 = vmatprep.subr.mxu0 0.0
    %699 = vmatpush1.msra.mxu0 0.0
    %700 = vmatprep.subr.mxu0 0.0
    %701 = vmatpush1.msra.mxu0 0.0
    %702 = vmatprep.subr.mxu0 0.0
    %703 = vmatpush1.msra.mxu0 0.0
    %704 = vmatprep.subr.mxu0 0.0
    %705 = vmatpush1.msra.mxu0 0.0
    %706 = vmatprep.subr.mxu0 0.0
    %707 = vmatpush1.msra.mxu0 0.0
    %708 = vmatprep.subr.mxu0 0.0
    %709 = vmatpush1.msra.mxu0 0.0
    %710 = vmatprep.subr.mxu0 0.0
    %711 = vmatpush1.msra.mxu0 0.0
    %712 = vmatprep.subr.mxu0 0.0
    %713 = vmatpush1.msra.mxu0 0.0
    %714 = vmatprep.subr.mxu0 0.0
    %715 = vmatpush1.msra.mxu0 0.0
    %716 = vmatprep.subr.mxu0 0.0
    %717 = vmatpush1.msra.mxu0 0.0
    %718 = vmatprep.subr.mxu0 0.0
    %719 = vmatpush1.msra.mxu0 0.0
    %720 = vmatprep.subr.mxu0 0.0
    %721 = vmatpush1.msra.mxu0 0.0
    %722 = vmatprep.subr.mxu0 0.0
    %723 = vmatpush1.msra.mxu0 0.0
    %724 = vmatprep.mubr.f32.mxu0 0.0
    %725 = vmatmul.mubr.f32.gmra.mrb[0].mxu0 %v587
    %v726 = vpop.f32.mrb[0].mxu0
    %v727 = vadd.f32 0.0, %v726
    %v728 = vpop.f32.mrb[0].mxu0
    %v729 = vadd.f32 0.0, %v728
    %730 = vdwg.mxu0
    %v731 = vld [vmem:[%s13] sm:$0xff]
    %v732 = vld [vmem:[%s13 + $0x8] sm:$0xff]
    %v733 = vld [vmem:[%s13 + $0x10] sm:$0xff]
    %v734 = vld [vmem:[%s13 + $0x18] sm:$0xff]
    %v735 = vld [vmem:[%s13 + $0x20] sm:$0xff]
    %v736 = vld [vmem:[%s13 + $0x28] sm:$0xff]
    %v737 = vld [vmem:[%s13 + $0x30] sm:$0xff]
    %v738 = vld [vmem:[%s13 + $0x38] sm:$0xff]
    %740 = vset.pattern.permute.xlu0 0
    %741 = vperm.xlu0 %740, %v731
    %v742 = vpop.permute.xlu0 %741
    %745 = vset.pattern.permute.xlu0 0
    %746 = vperm.xlu0 %745, %v732
    %v747 = vpop.permute.xlu0 %746
    %750 = vset.pattern.permute.xlu0 0
    %751 = vperm.xlu0 %750, %v733
    %v752 = vpop.permute.xlu0 %751
    %755 = vset.pattern.permute.xlu0 0
    %756 = vperm.xlu0 %755, %v734
    %v757 = vpop.permute.xlu0 %756
    %760 = vset.pattern.permute.xlu0 0
    %761 = vperm.xlu0 %760, %v735
    %v762 = vpop.permute.xlu0 %761
    %765 = vset.pattern.permute.xlu0 0
    %766 = vperm.xlu0 %765, %v736
    %v767 = vpop.permute.xlu0 %766
    %770 = vset.pattern.permute.xlu0 0
    %771 = vperm.xlu0 %770, %v737
    %v772 = vpop.permute.xlu0 %771
    %775 = vset.pattern.permute.xlu0 0
    %776 = vperm.xlu0 %775, %v738
    %v777 = vpop.permute.xlu0 %776
    %v779 = vlaneseq
    %v780 = vshrl.u32 %v779, 7
    %v781 = vsub.s32 0, %v780
    %v782 = vrot.slane %v656, %v781
    %v783 = vmul.f32 %v742, %v782
    %v784 = vmul.f32 %v752, %v782
    %v785 = vmul.f32 %v757, %v782
    %v786 = vmul.f32 %v762, %v782
    %v787 = vmul.f32 %v767, %v782
    %v788 = vmul.f32 %v772, %v782
    %v789 = vmul.f32 %v777, %v782
    %790 = vset.pattern.permute.xlu0 1
    %791 = vperm.xlu0 %790, %v731
    %v792 = vpop.permute.xlu0 %791
    %794 = vset.pattern.permute.xlu0 1
    %795 = vperm.xlu0 %794, %v732
    %v796 = vpop.permute.xlu0 %795
    %798 = vset.pattern.permute.xlu0 1
    %799 = vperm.xlu0 %798, %v733
    %v800 = vpop.permute.xlu0 %799
    %802 = vset.pattern.permute.xlu0 1
    %803 = vperm.xlu0 %802, %v734
    %v804 = vpop.permute.xlu0 %803
    %806 = vset.pattern.permute.xlu0 1
    %807 = vperm.xlu0 %806, %v735
    %v808 = vpop.permute.xlu0 %807
    %810 = vset.pattern.permute.xlu0 1
    %811 = vperm.xlu0 %810, %v736
    %v812 = vpop.permute.xlu0 %811
    %814 = vset.pattern.permute.xlu0 1
    %815 = vperm.xlu0 %814, %v737
    %v816 = vpop.permute.xlu0 %815
    %818 = vset.pattern.permute.xlu0 1
    %819 = vperm.xlu0 %818, %v738
    %v820 = vpop.permute.xlu0 %819
    %v822 = vmul.f32 %v792, %v782
    %v823 = vmul.f32 %v800, %v782
    %v824 = vmul.f32 %v804, %v782
    %v825 = vmul.f32 %v808, %v782
    %v826 = vmul.f32 %v812, %v782
    %v827 = vmul.f32 %v816, %v782
    %v828 = vmul.f32 %v820, %v782
    %836 = vrot.lane.b32.xlu0 %v822, 64
    %v837 = vpop.permute.xlu0 %836
    %838 = vrot.lane.b32.xlu0 %v823, 64
    %v839 = vpop.permute.xlu0 %838
    %840 = vrot.lane.b32.xlu0 %v824, 64
    %v841 = vpop.permute.xlu0 %840
    %842 = vrot.lane.b32.xlu0 %v825, 64
    %v843 = vpop.permute.xlu0 %842
    %844 = vrot.lane.b32.xlu0 %v826, 64
    %v845 = vpop.permute.xlu0 %844
    %846 = vrot.lane.b32.xlu0 %v827, 64
    %v847 = vpop.permute.xlu0 %846
    %848 = vrot.lane.b32.xlu0 %v828, 64
    %v849 = vpop.permute.xlu0 %848
    %v857 = vadd.f32 %v783, %v837
    %v858 = vadd.f32 %v784, %v839
    %v859 = vadd.f32 %v785, %v841
    %v860 = vadd.f32 %v786, %v843
    %v861 = vadd.f32 %v787, %v845
    %v862 = vadd.f32 %v788, %v847
    %v863 = vadd.f32 %v789, %v849
    %864 = vset.pattern.permute.xlu0 2
    %865 = vperm.xlu0 %864, %v731
    %v866 = vpop.permute.xlu0 %865
    %868 = vset.pattern.permute.xlu0 2
    %869 = vperm.xlu0 %868, %v732
    %v870 = vpop.permute.xlu0 %869
    %872 = vset.pattern.permute.xlu0 2
    %873 = vperm.xlu0 %872, %v733
    %v874 = vpop.permute.xlu0 %873
    %876 = vset.pattern.permute.xlu0 2
    %877 = vperm.xlu0 %876, %v734
    %v878 = vpop.permute.xlu0 %877
    %880 = vset.pattern.permute.xlu0 2
    %881 = vperm.xlu0 %880, %v735
    %v882 = vpop.permute.xlu0 %881
    %884 = vset.pattern.permute.xlu0 2
    %885 = vperm.xlu0 %884, %v736
    %v886 = vpop.permute.xlu0 %885
    %888 = vset.pattern.permute.xlu0 2
    %889 = vperm.xlu0 %888, %v737
    %v890 = vpop.permute.xlu0 %889
    %892 = vset.pattern.permute.xlu0 2
    %893 = vperm.xlu0 %892, %v738
    %v894 = vpop.permute.xlu0 %893
    %v896 = vlaneseq
    %v897 = vshrl.u32 %v896, 7
    %v898 = vsub.s32 0, %v897
    %v899 = vrot.slane %v658, %v898
    %v900 = vmul.f32 %v866, %v899
    %v901 = vmul.f32 %v874, %v899
    %v902 = vmul.f32 %v878, %v899
    %v903 = vmul.f32 %v882, %v899
    %v904 = vmul.f32 %v886, %v899
    %v905 = vmul.f32 %v890, %v899
    %v906 = vmul.f32 %v894, %v899
    %v907 = vadd.f32 %v857, %v900
    %v908 = vadd.f32 %v858, %v901
    %v909 = vadd.f32 %v859, %v902
    %v910 = vadd.f32 %v860, %v903
    %v911 = vadd.f32 %v861, %v904
    %v912 = vadd.f32 %v862, %v905
    %v913 = vadd.f32 %v863, %v906
    %914 = vset.pattern.permute.xlu0 3
    %915 = vperm.xlu0 %914, %v731
    %v916 = vpop.permute.xlu0 %915
    %918 = vset.pattern.permute.xlu0 3
    %919 = vperm.xlu0 %918, %v732
    %v920 = vpop.permute.xlu0 %919
    %922 = vset.pattern.permute.xlu0 3
    %923 = vperm.xlu0 %922, %v733
    %v924 = vpop.permute.xlu0 %923
    %926 = vset.pattern.permute.xlu0 3
    %927 = vperm.xlu0 %926, %v734
    %v928 = vpop.permute.xlu0 %927
    %930 = vset.pattern.permute.xlu0 3
    %931 = vperm.xlu0 %930, %v735
    %v932 = vpop.permute.xlu0 %931
    %934 = vset.pattern.permute.xlu0 3
    %935 = vperm.xlu0 %934, %v736
    %v936 = vpop.permute.xlu0 %935
    %938 = vset.pattern.permute.xlu0 3
    %939 = vperm.xlu0 %938, %v737
    %v940 = vpop.permute.xlu0 %939
    %942 = vset.pattern.permute.xlu0 3
    %943 = vperm.xlu0 %942, %v738
    %v944 = vpop.permute.xlu0 %943
    %v946 = vmul.f32 %v916, %v899
    %v947 = vmul.f32 %v924, %v899
    %v948 = vmul.f32 %v928, %v899
    %v949 = vmul.f32 %v932, %v899
    %v950 = vmul.f32 %v936, %v899
    %v951 = vmul.f32 %v940, %v899
    %v952 = vmul.f32 %v944, %v899
    %960 = vrot.lane.b32.xlu0 %v946, 64
    %v961 = vpop.permute.xlu0 %960
    %962 = vrot.lane.b32.xlu0 %v947, 64
    %v963 = vpop.permute.xlu0 %962
    %964 = vrot.lane.b32.xlu0 %v948, 64
    %v965 = vpop.permute.xlu0 %964
    %966 = vrot.lane.b32.xlu0 %v949, 64
    %v967 = vpop.permute.xlu0 %966
    %968 = vrot.lane.b32.xlu0 %v950, 64
    %v969 = vpop.permute.xlu0 %968
    %970 = vrot.lane.b32.xlu0 %v951, 64
    %v971 = vpop.permute.xlu0 %970
    %972 = vrot.lane.b32.xlu0 %v952, 64
    %v973 = vpop.permute.xlu0 %972
    %v981 = vadd.f32 %v907, %v961
    %v982 = vadd.f32 %v908, %v963
    %v983 = vadd.f32 %v909, %v965
    %v984 = vadd.f32 %v910, %v967
    %v985 = vadd.f32 %v911, %v969
    %v986 = vadd.f32 %v912, %v971
    %v987 = vadd.f32 %v913, %v973
    %988 = vset.pattern.permute.xlu0 4
    %989 = vperm.xlu0 %988, %v731
    %v990 = vpop.permute.xlu0 %989
    %992 = vset.pattern.permute.xlu0 4
    %993 = vperm.xlu0 %992, %v732
    %v994 = vpop.permute.xlu0 %993
    %996 = vset.pattern.permute.xlu0 4
    %997 = vperm.xlu0 %996, %v733
    %v998 = vpop.permute.xlu0 %997
    %1000 = vset.pattern.permute.xlu0 4
    %1001 = vperm.xlu0 %1000, %v734
    %v1002 = vpop.permute.xlu0 %1001
    %1004 = vset.pattern.permute.xlu0 4
    %1005 = vperm.xlu0 %1004, %v735
    %v1006 = vpop.permute.xlu0 %1005
    %1008 = vset.pattern.permute.xlu0 4
    %1009 = vperm.xlu0 %1008, %v736
    %v1010 = vpop.permute.xlu0 %1009
    %1012 = vset.pattern.permute.xlu0 4
    %1013 = vperm.xlu0 %1012, %v737
    %v1014 = vpop.permute.xlu0 %1013
    %1016 = vset.pattern.permute.xlu0 4
    %1017 = vperm.xlu0 %1016, %v738
    %v1018 = vpop.permute.xlu0 %1017
    %v1020 = vlaneseq
    %v1021 = vshrl.u32 %v1020, 7
    %v1022 = vsub.s32 0, %v1021
    %v1023 = vrot.slane %v727, %v1022
    %v1024 = vmul.f32 %v990, %v1023
    %v1025 = vmul.f32 %v998, %v1023
    %v1026 = vmul.f32 %v1002, %v1023
    %v1027 = vmul.f32 %v1006, %v1023
    %v1028 = vmul.f32 %v1010, %v1023
    %v1029 = vmul.f32 %v1014, %v1023
    %v1030 = vmul.f32 %v1018, %v1023
    %v1031 = vadd.f32 %v981, %v1024
    %v1032 = vadd.f32 %v982, %v1025
    %v1033 = vadd.f32 %v983, %v1026
    %v1034 = vadd.f32 %v984, %v1027
    %v1035 = vadd.f32 %v985, %v1028
    %v1036 = vadd.f32 %v986, %v1029
    %v1037 = vadd.f32 %v987, %v1030
    %1038 = vset.pattern.permute.xlu0 5
    %1039 = vperm.xlu0 %1038, %v731
    %v1040 = vpop.permute.xlu0 %1039
    %1042 = vset.pattern.permute.xlu0 5
    %1043 = vperm.xlu0 %1042, %v732
    %v1044 = vpop.permute.xlu0 %1043
    %1046 = vset.pattern.permute.xlu0 5
    %1047 = vperm.xlu0 %1046, %v733
    %v1048 = vpop.permute.xlu0 %1047
    %1050 = vset.pattern.permute.xlu0 5
    %1051 = vperm.xlu0 %1050, %v734
    %v1052 = vpop.permute.xlu0 %1051
    %1054 = vset.pattern.permute.xlu0 5
    %1055 = vperm.xlu0 %1054, %v735
    %v1056 = vpop.permute.xlu0 %1055
    %1058 = vset.pattern.permute.xlu0 5
    %1059 = vperm.xlu0 %1058, %v736
    %v1060 = vpop.permute.xlu0 %1059
    %1062 = vset.pattern.permute.xlu0 5
    %1063 = vperm.xlu0 %1062, %v737
    %v1064 = vpop.permute.xlu0 %1063
    %1066 = vset.pattern.permute.xlu0 5
    %1067 = vperm.xlu0 %1066, %v738
    %v1068 = vpop.permute.xlu0 %1067
    %v1070 = vmul.f32 %v1040, %v1023
    %v1071 = vmul.f32 %v1048, %v1023
    %v1072 = vmul.f32 %v1052, %v1023
    %v1073 = vmul.f32 %v1056, %v1023
    %v1074 = vmul.f32 %v1060, %v1023
    %v1075 = vmul.f32 %v1064, %v1023
    %v1076 = vmul.f32 %v1068, %v1023
    %1084 = vrot.lane.b32.xlu0 %v1070, 64
    %v1085 = vpop.permute.xlu0 %1084
    %1086 = vrot.lane.b32.xlu0 %v1071, 64
    %v1087 = vpop.permute.xlu0 %1086
    %1088 = vrot.lane.b32.xlu0 %v1072, 64
    %v1089 = vpop.permute.xlu0 %1088
    %1090 = vrot.lane.b32.xlu0 %v1073, 64
    %v1091 = vpop.permute.xlu0 %1090
    %1092 = vrot.lane.b32.xlu0 %v1074, 64
    %v1093 = vpop.permute.xlu0 %1092
    %1094 = vrot.lane.b32.xlu0 %v1075, 64
    %v1095 = vpop.permute.xlu0 %1094
    %1096 = vrot.lane.b32.xlu0 %v1076, 64
    %v1097 = vpop.permute.xlu0 %1096
    %v1105 = vadd.f32 %v1031, %v1085
    %v1106 = vadd.f32 %v1032, %v1087
    %v1107 = vadd.f32 %v1033, %v1089
    %v1108 = vadd.f32 %v1034, %v1091
    %v1109 = vadd.f32 %v1035, %v1093
    %v1110 = vadd.f32 %v1036, %v1095
    %v1111 = vadd.f32 %v1037, %v1097
    %1112 = vset.pattern.permute.xlu0 6
    %1113 = vperm.xlu0 %1112, %v731
    %v1114 = vpop.permute.xlu0 %1113
    %1116 = vset.pattern.permute.xlu0 6
    %1117 = vperm.xlu0 %1116, %v732
    %v1118 = vpop.permute.xlu0 %1117
    %1120 = vset.pattern.permute.xlu0 6
    %1121 = vperm.xlu0 %1120, %v733
    %v1122 = vpop.permute.xlu0 %1121
    %1124 = vset.pattern.permute.xlu0 6
    %1125 = vperm.xlu0 %1124, %v734
    %v1126 = vpop.permute.xlu0 %1125
    %1128 = vset.pattern.permute.xlu0 6
    %1129 = vperm.xlu0 %1128, %v735
    %v1130 = vpop.permute.xlu0 %1129
    %1132 = vset.pattern.permute.xlu0 6
    %1133 = vperm.xlu0 %1132, %v736
    %v1134 = vpop.permute.xlu0 %1133
    %1136 = vset.pattern.permute.xlu0 6
    %1137 = vperm.xlu0 %1136, %v737
    %v1138 = vpop.permute.xlu0 %1137
    %1140 = vset.pattern.permute.xlu0 6
    %1141 = vperm.xlu0 %1140, %v738
    %v1142 = vpop.permute.xlu0 %1141
    %v1144 = vlaneseq
    %v1145 = vshrl.u32 %v1144, 7
    %v1146 = vsub.s32 0, %v1145
    %v1147 = vrot.slane %v729, %v1146
    %v1148 = vmul.f32 %v1114, %v1147
    %v1149 = vmul.f32 %v1122, %v1147
    %v1150 = vmul.f32 %v1126, %v1147
    %v1151 = vmul.f32 %v1130, %v1147
    %v1152 = vmul.f32 %v1134, %v1147
    %v1153 = vmul.f32 %v1138, %v1147
    %v1154 = vmul.f32 %v1142, %v1147
    %v1155 = vadd.f32 %v1105, %v1148
    %v1156 = vadd.f32 %v1106, %v1149
    %v1157 = vadd.f32 %v1107, %v1150
    %v1158 = vadd.f32 %v1108, %v1151
    %v1159 = vadd.f32 %v1109, %v1152
    %v1160 = vadd.f32 %v1110, %v1153
    %v1161 = vadd.f32 %v1111, %v1154
    %1162 = vset.pattern.permute.xlu0 7
    %1163 = vperm.xlu0 %1162, %v731
    %v1164 = vpop.permute.xlu0 %1163
    %1166 = vset.pattern.permute.xlu0 7
    %1167 = vperm.xlu0 %1166, %v732
    %v1168 = vpop.permute.xlu0 %1167
    %1170 = vset.pattern.permute.xlu0 7
    %1171 = vperm.xlu0 %1170, %v733
    %v1172 = vpop.permute.xlu0 %1171
    %1174 = vset.pattern.permute.xlu0 7
    %1175 = vperm.xlu0 %1174, %v734
    %v1176 = vpop.permute.xlu0 %1175
    %1178 = vset.pattern.permute.xlu0 7
    %1179 = vperm.xlu0 %1178, %v735
    %v1180 = vpop.permute.xlu0 %1179
    %1182 = vset.pattern.permute.xlu0 7
    %1183 = vperm.xlu0 %1182, %v736
    %v1184 = vpop.permute.xlu0 %1183
    %1186 = vset.pattern.permute.xlu0 7
    %1187 = vperm.xlu0 %1186, %v737
    %v1188 = vpop.permute.xlu0 %1187
    %1190 = vset.pattern.permute.xlu0 7
    %1191 = vperm.xlu0 %1190, %v738
    %v1192 = vpop.permute.xlu0 %1191
    %v1194 = vmul.f32 %v1164, %v1147
    %v1195 = vmul.f32 %v1172, %v1147
    %v1196 = vmul.f32 %v1176, %v1147
    %v1197 = vmul.f32 %v1180, %v1147
    %v1198 = vmul.f32 %v1184, %v1147
    %v1199 = vmul.f32 %v1188, %v1147
    %v1200 = vmul.f32 %v1192, %v1147
    %1208 = vrot.lane.b32.xlu0 %v1194, 64
    %v1209 = vpop.permute.xlu0 %1208
    %1210 = vrot.lane.b32.xlu0 %v1195, 64
    %v1211 = vpop.permute.xlu0 %1210
    %1212 = vrot.lane.b32.xlu0 %v1196, 64
    %v1213 = vpop.permute.xlu0 %1212
    %1214 = vrot.lane.b32.xlu0 %v1197, 64
    %v1215 = vpop.permute.xlu0 %1214
    %1216 = vrot.lane.b32.xlu0 %v1198, 64
    %v1217 = vpop.permute.xlu0 %1216
    %1218 = vrot.lane.b32.xlu0 %v1199, 64
    %v1219 = vpop.permute.xlu0 %1218
    %1220 = vrot.lane.b32.xlu0 %v1200, 64
    %v1221 = vpop.permute.xlu0 %1220
    %v1229 = vadd.f32 %v1155, %v1209
    %v1230 = vadd.f32 %v1156, %v1211
    %v1231 = vadd.f32 %v1157, %v1213
    %v1232 = vadd.f32 %v1158, %v1215
    %v1233 = vadd.f32 %v1159, %v1217
    %v1234 = vadd.f32 %v1160, %v1219
    %v1235 = vadd.f32 %v1161, %v1221
    %v1236 = vlaneseq
    %v1237 = vshrl.u32 %v1236, 7
    %v1238 = vsub.s32 1, %v1237
    %v1239 = vrot.slane %v656, %v1238
    %v1240 = vmul.f32 %v742, %v1239
    %v1241 = vmul.f32 %v747, %v1239
    %v1242 = vmul.f32 %v752, %v1239
    %v1243 = vmul.f32 %v757, %v1239
    %v1244 = vmul.f32 %v762, %v1239
    %v1245 = vmul.f32 %v772, %v1239
    %v1246 = vmul.f32 %v777, %v1239
    %v1247 = vmul.f32 %v792, %v1239
    %v1248 = vmul.f32 %v796, %v1239
    %v1249 = vmul.f32 %v800, %v1239
    %v1250 = vmul.f32 %v804, %v1239
    %v1251 = vmul.f32 %v808, %v1239
    %v1252 = vmul.f32 %v816, %v1239
    %v1253 = vmul.f32 %v820, %v1239
    %1261 = vrot.lane.b32.xlu0 %v1247, 64
    %v1262 = vpop.permute.xlu0 %1261
    %1263 = vrot.lane.b32.xlu0 %v1248, 64
    %v1264 = vpop.permute.xlu0 %1263
    %1265 = vrot.lane.b32.xlu0 %v1249, 64
    %v1266 = vpop.permute.xlu0 %1265
    %1267 = vrot.lane.b32.xlu0 %v1250, 64
    %v1268 = vpop.permute.xlu0 %1267
    %1269 = vrot.lane.b32.xlu0 %v1251, 64
    %v1270 = vpop.permute.xlu0 %1269
    %1271 = vrot.lane.b32.xlu0 %v1252, 64
    %v1272 = vpop.permute.xlu0 %1271
    %1273 = vrot.lane.b32.xlu0 %v1253, 64
    %v1274 = vpop.permute.xlu0 %1273
    %v1282 = vadd.f32 %v1240, %v1262
    %v1283 = vadd.f32 %v1241, %v1264
    %v1284 = vadd.f32 %v1242, %v1266
    %v1285 = vadd.f32 %v1243, %v1268
    %v1286 = vadd.f32 %v1244, %v1270
    %v1287 = vadd.f32 %v1245, %v1272
    %v1288 = vadd.f32 %v1246, %v1274
    %v1289 = vlaneseq
    %v1290 = vshrl.u32 %v1289, 7
    %v1291 = vsub.s32 1, %v1290
    %v1292 = vrot.slane %v658, %v1291
    %v1293 = vmul.f32 %v866, %v1292
    %v1294 = vmul.f32 %v870, %v1292
    %v1295 = vmul.f32 %v874, %v1292
    %v1296 = vmul.f32 %v878, %v1292
    %v1297 = vmul.f32 %v882, %v1292
    %v1298 = vmul.f32 %v890, %v1292
    %v1299 = vmul.f32 %v894, %v1292
    %v1300 = vadd.f32 %v1282, %v1293
    %v1301 = vadd.f32 %v1283, %v1294
    %v1302 = vadd.f32 %v1284, %v1295
    %v1303 = vadd.f32 %v1285, %v1296
    %v1304 = vadd.f32 %v1286, %v1297
    %v1305 = vadd.f32 %v1287, %v1298
    %v1306 = vadd.f32 %v1288, %v1299
    %v1307 = vmul.f32 %v916, %v1292
    %v1308 = vmul.f32 %v920, %v1292
    %v1309 = vmul.f32 %v924, %v1292
    %v1310 = vmul.f32 %v928, %v1292
    %v1311 = vmul.f32 %v932, %v1292
    %v1312 = vmul.f32 %v940, %v1292
    %v1313 = vmul.f32 %v944, %v1292
    %1321 = vrot.lane.b32.xlu0 %v1307, 64
    %v1322 = vpop.permute.xlu0 %1321
    %1323 = vrot.lane.b32.xlu0 %v1308, 64
    %v1324 = vpop.permute.xlu0 %1323
    %1325 = vrot.lane.b32.xlu0 %v1309, 64
    %v1326 = vpop.permute.xlu0 %1325
    %1327 = vrot.lane.b32.xlu0 %v1310, 64
    %v1328 = vpop.permute.xlu0 %1327
    %1329 = vrot.lane.b32.xlu0 %v1311, 64
    %v1330 = vpop.permute.xlu0 %1329
    %1331 = vrot.lane.b32.xlu0 %v1312, 64
    %v1332 = vpop.permute.xlu0 %1331
    %1333 = vrot.lane.b32.xlu0 %v1313, 64
    %v1334 = vpop.permute.xlu0 %1333
    %v1342 = vadd.f32 %v1300, %v1322
    %v1343 = vadd.f32 %v1301, %v1324
    %v1344 = vadd.f32 %v1302, %v1326
    %v1345 = vadd.f32 %v1303, %v1328
    %v1346 = vadd.f32 %v1304, %v1330
    %v1347 = vadd.f32 %v1305, %v1332
    %v1348 = vadd.f32 %v1306, %v1334
    %v1349 = vlaneseq
    %v1350 = vshrl.u32 %v1349, 7
    %v1351 = vsub.s32 1, %v1350
    %v1352 = vrot.slane %v727, %v1351
    %v1353 = vmul.f32 %v990, %v1352
    %v1354 = vmul.f32 %v994, %v1352
    %v1355 = vmul.f32 %v998, %v1352
    %v1356 = vmul.f32 %v1002, %v1352
    %v1357 = vmul.f32 %v1006, %v1352
    %v1358 = vmul.f32 %v1014, %v1352
    %v1359 = vmul.f32 %v1018, %v1352
    %v1360 = vadd.f32 %v1342, %v1353
    %v1361 = vadd.f32 %v1343, %v1354
    %v1362 = vadd.f32 %v1344, %v1355
    %v1363 = vadd.f32 %v1345, %v1356
    %v1364 = vadd.f32 %v1346, %v1357
    %v1365 = vadd.f32 %v1347, %v1358
    %v1366 = vadd.f32 %v1348, %v1359
    %v1367 = vmul.f32 %v1040, %v1352
    %v1368 = vmul.f32 %v1044, %v1352
    %v1369 = vmul.f32 %v1048, %v1352
    %v1370 = vmul.f32 %v1052, %v1352
    %v1371 = vmul.f32 %v1056, %v1352
    %v1372 = vmul.f32 %v1064, %v1352
    %v1373 = vmul.f32 %v1068, %v1352
    %1381 = vrot.lane.b32.xlu0 %v1367, 64
    %v1382 = vpop.permute.xlu0 %1381
    %1383 = vrot.lane.b32.xlu0 %v1368, 64
    %v1384 = vpop.permute.xlu0 %1383
    %1385 = vrot.lane.b32.xlu0 %v1369, 64
    %v1386 = vpop.permute.xlu0 %1385
    %1387 = vrot.lane.b32.xlu0 %v1370, 64
    %v1388 = vpop.permute.xlu0 %1387
    %1389 = vrot.lane.b32.xlu0 %v1371, 64
    %v1390 = vpop.permute.xlu0 %1389
    %1391 = vrot.lane.b32.xlu0 %v1372, 64
    %v1392 = vpop.permute.xlu0 %1391
    %1393 = vrot.lane.b32.xlu0 %v1373, 64
    %v1394 = vpop.permute.xlu0 %1393
    %v1402 = vadd.f32 %v1360, %v1382
    %v1403 = vadd.f32 %v1361, %v1384
    %v1404 = vadd.f32 %v1362, %v1386
    %v1405 = vadd.f32 %v1363, %v1388
    %v1406 = vadd.f32 %v1364, %v1390
    %v1407 = vadd.f32 %v1365, %v1392
    %v1408 = vadd.f32 %v1366, %v1394
    %v1409 = vlaneseq
    %v1410 = vshrl.u32 %v1409, 7
    %v1411 = vsub.s32 1, %v1410
    %v1412 = vrot.slane %v729, %v1411
    %v1413 = vmul.f32 %v1114, %v1412
    %v1414 = vmul.f32 %v1118, %v1412
    %v1415 = vmul.f32 %v1122, %v1412
    %v1416 = vmul.f32 %v1126, %v1412
    %v1417 = vmul.f32 %v1130, %v1412
    %v1418 = vmul.f32 %v1138, %v1412
    %v1419 = vmul.f32 %v1142, %v1412
    %v1420 = vadd.f32 %v1402, %v1413
    %v1421 = vadd.f32 %v1403, %v1414
    %v1422 = vadd.f32 %v1404, %v1415
    %v1423 = vadd.f32 %v1405, %v1416
    %v1424 = vadd.f32 %v1406, %v1417
    %v1425 = vadd.f32 %v1407, %v1418
    %v1426 = vadd.f32 %v1408, %v1419
    %v1427 = vmul.f32 %v1164, %v1412
    %v1428 = vmul.f32 %v1168, %v1412
    %v1429 = vmul.f32 %v1172, %v1412
    %v1430 = vmul.f32 %v1176, %v1412
    %v1431 = vmul.f32 %v1180, %v1412
    %v1432 = vmul.f32 %v1188, %v1412
    %v1433 = vmul.f32 %v1192, %v1412
    %1441 = vrot.lane.b32.xlu0 %v1427, 64
    %v1442 = vpop.permute.xlu0 %1441
    %1443 = vrot.lane.b32.xlu0 %v1428, 64
    %v1444 = vpop.permute.xlu0 %1443
    %1445 = vrot.lane.b32.xlu0 %v1429, 64
    %v1446 = vpop.permute.xlu0 %1445
    %1447 = vrot.lane.b32.xlu0 %v1430, 64
    %v1448 = vpop.permute.xlu0 %1447
    %1449 = vrot.lane.b32.xlu0 %v1431, 64
    %v1450 = vpop.permute.xlu0 %1449
    %1451 = vrot.lane.b32.xlu0 %v1432, 64
    %v1452 = vpop.permute.xlu0 %1451
    %1453 = vrot.lane.b32.xlu0 %v1433, 64
    %v1454 = vpop.permute.xlu0 %1453
    %v1462 = vadd.f32 %v1420, %v1442
    %v1463 = vadd.f32 %v1421, %v1444
    %v1464 = vadd.f32 %v1422, %v1446
    %v1465 = vadd.f32 %v1423, %v1448
    %v1466 = vadd.f32 %v1424, %v1450
    %v1467 = vadd.f32 %v1425, %v1452
    %v1468 = vadd.f32 %v1426, %v1454
    %v1469 = vld [vmem:[%s15] sm:$0xff]
    %v1470 = vld [vmem:[%s15 + $0x8] sm:$0xff]
    %v1471 = vld [vmem:[%s15 + $0x10] sm:$0xff]
    %v1472 = vld [vmem:[%s15 + $0x18] sm:$0xff]
    %v1473 = vld [vmem:[%s15 + $0x20] sm:$0xff]
    %v1474 = vld [vmem:[%s15 + $0x28] sm:$0xff]
    %v1475 = vld [vmem:[%s15 + $0x30] sm:$0xff]
    %v1476 = vld [vmem:[%s15 + $0x38] sm:$0xff]
    %1478 = vset.pattern.permute.xlu0 0
    %1479 = vperm.xlu0 %1478, %v1469
    %v1480 = vpop.permute.xlu0 %1479
    %1483 = vset.pattern.permute.xlu0 0
    %1484 = vperm.xlu0 %1483, %v1470
    %v1485 = vpop.permute.xlu0 %1484
    %1488 = vset.pattern.permute.xlu0 0
    %1489 = vperm.xlu0 %1488, %v1471
    %v1490 = vpop.permute.xlu0 %1489
    %1493 = vset.pattern.permute.xlu0 0
    %1494 = vperm.xlu0 %1493, %v1472
    %v1495 = vpop.permute.xlu0 %1494
    %1498 = vset.pattern.permute.xlu0 0
    %1499 = vperm.xlu0 %1498, %v1473
    %v1500 = vpop.permute.xlu0 %1499
    %1503 = vset.pattern.permute.xlu0 0
    %1504 = vperm.xlu0 %1503, %v1474
    %v1505 = vpop.permute.xlu0 %1504
    %1508 = vset.pattern.permute.xlu0 0
    %1509 = vperm.xlu0 %1508, %v1475
    %v1510 = vpop.permute.xlu0 %1509
    %1513 = vset.pattern.permute.xlu0 0
    %1514 = vperm.xlu0 %1513, %v1476
    %v1515 = vpop.permute.xlu0 %1514
    %v1517 = vadd.f32 %v1229, %v1480
    %v1518 = vadd.f32 %v1466, %v1485
    %v1519 = vadd.f32 %v1230, %v1500
    %v1520 = vadd.f32 %v1467, %v1505
    %v1521 = vadd.f32 %v1231, %v1510
    %v1522 = vadd.f32 %v1468, %v1515
    %v1523 = vadd.f32 %v1462, %v1480
    %v1524 = vadd.f32 %v1232, %v1485
    %v1525 = vadd.f32 %v1463, %v1490
    %v1526 = vadd.f32 %v1233, %v1495
    %v1527 = vadd.f32 %v1464, %v1500
    %v1528 = vadd.f32 %v1234, %v1505
    %v1529 = vadd.f32 %v1465, %v1510
    %v1530 = vadd.f32 %v1235, %v1515
    %v1531 = vld [vmem:[%s14] sm:$0xff]
    %v1532 = vld [vmem:[%s14 + $0x8] sm:$0xff]
    %v1533 = vld [vmem:[%s14 + $0x10] sm:$0xff]
    %v1534 = vld [vmem:[%s14 + $0x18] sm:$0xff]
    %v1535 = vld [vmem:[%s14 + $0x20] sm:$0xff]
    %v1536 = vld [vmem:[%s14 + $0x28] sm:$0xff]
    %v1537 = vld [vmem:[%s14 + $0x30] sm:$0xff]
    %v1538 = vld [vmem:[%s14 + $0x38] sm:$0xff]
    %v1539 = vxor.u32 %v1517, 2147483648
    %v1540 = vxor.u32 %v1518, 2147483648
    %v1541 = vmul.f32 %v1539, 1.442695
    %v1542 = vpow.pop %v1541
    %v1543 = vmul.f32 %v1540, 1.442695
    %v1544 = vpow.pop %v1543
    %v1545 = vadd.f32 %v1542, 1.0
    %v1546 = vadd.f32 %v1544, 1.0
    %v1547 = vrcp.pop %v1545
    %v1548 = vmul.f32 1.0, %v1547
    %v1549 = vrcp.pop %v1546
    %v1550 = vmul.f32 1.0, %v1549
    %v1551 = vtanh.pop %v1519
    %v1552 = vtanh.pop %v1520
    %v1553 = vxor.u32 %v1521, 2147483648
    %v1554 = vxor.u32 %v1522, 2147483648
    %v1555 = vmul.f32 %v1553, 1.442695
    %v1556 = vpow.pop %v1555
    %v1557 = vmul.f32 %v1554, 1.442695
    %v1558 = vpow.pop %v1557
    %v1559 = vadd.f32 %v1556, 1.0
    %v1560 = vadd.f32 %v1558, 1.0
    %v1561 = vrcp.pop %v1559
    %v1562 = vmul.f32 1.0, %v1561
    %v1563 = vrcp.pop %v1560
    %v1564 = vmul.f32 1.0, %v1563
    %v1565 = vmul.f32 %v1548, %v1551
    %v1566 = vmul.f32 %v1550, %v1552
    %v1567 = vtanh.pop %v1565
    %v1568 = vtanh.pop %v1566
    %v1569 = vmul.f32 %v1562, %v1567
    %v1570 = vmul.f32 %v1564, %v1568
    %v1571 = vld [vmem:[%s16] sm:$0x3]
    %v1573 = vsel %vm479, %v1531, 0
    %v1576 = vsel %vm479, %v1532, 0
    %v1579 = vsel %vm479, %v1533, 0
    %v1582 = vsel %vm479, %v1534, 0
    %v1585 = vsel %vm479, %v1535, 0
    %v1588 = vsel %vm479, %v1536, 0
    %v1591 = vsel %vm479, %v1537, 0
    %v1594 = vsel %vm479, %v1538, 0
    %1596 = vmatprep.subr.mxu0 0.0
    %1597 = vmatpush1.msra.mxu0 %v1569
    %1598 = vmatprep.subr.mxu0 0.0
    %1599 = vmatpush1.msra.mxu0 %v1570
    %1600 = vmatprep.subr.mxu0 0.0
    %1601 = vmatpush1.msra.mxu0 0.0
    %1602 = vmatprep.subr.mxu0 0.0
    %1603 = vmatpush1.msra.mxu0 0.0
    %1604 = vmatprep.subr.mxu0 0.0
    %1605 = vmatpush1.msra.mxu0 0.0
    %1606 = vmatprep.subr.mxu0 0.0
    %1607 = vmatpush1.msra.mxu0 0.0
    %1608 = vmatprep.subr.mxu0 0.0
    %1609 = vmatpush1.msra.mxu0 0.0
    %1610 = vmatprep.subr.mxu0 0.0
    %1611 = vmatpush1.msra.mxu0 0.0
    %1612 = vmatprep.subr.mxu0 0.0
    %1613 = vmatpush1.msra.mxu0 0.0
    %1614 = vmatprep.subr.mxu0 0.0
    %1615 = vmatpush1.msra.mxu0 0.0
    %1616 = vmatprep.subr.mxu0 0.0
    %1617 = vmatpush1.msra.mxu0 0.0
    %1618 = vmatprep.subr.mxu0 0.0
    %1619 = vmatpush1.msra.mxu0 0.0
    %1620 = vmatprep.subr.mxu0 0.0
    %1621 = vmatpush1.msra.mxu0 0.0
    %1622 = vmatprep.subr.mxu0 0.0
    %1623 = vmatpush1.msra.mxu0 0.0
    %1624 = vmatprep.subr.mxu0 0.0
    %1625 = vmatpush1.msra.mxu0 0.0
    %1626 = vmatprep.subr.mxu0 0.0
    %1627 = vmatpush1.msra.mxu0 0.0
    %1628 = vmatprep.subr.mxu0 0.0
    %1629 = vmatpush1.msra.mxu0 0.0
    %1630 = vmatprep.subr.mxu0 0.0
    %1631 = vmatpush1.msra.mxu0 0.0
    %1632 = vmatprep.subr.mxu0 0.0
    %1633 = vmatpush1.msra.mxu0 0.0
    %1634 = vmatprep.subr.mxu0 0.0
    %1635 = vmatpush1.msra.mxu0 0.0
    %1636 = vmatprep.subr.mxu0 0.0
    %1637 = vmatpush1.msra.mxu0 0.0
    %1638 = vmatprep.subr.mxu0 0.0
    %1639 = vmatpush1.msra.mxu0 0.0
    %1640 = vmatprep.subr.mxu0 0.0
    %1641 = vmatpush1.msra.mxu0 0.0
    %1642 = vmatprep.subr.mxu0 0.0
    %1643 = vmatpush1.msra.mxu0 0.0
    %1644 = vmatprep.subr.mxu0 0.0
    %1645 = vmatpush1.msra.mxu0 0.0
    %1646 = vmatprep.subr.mxu0 0.0
    %1647 = vmatpush1.msra.mxu0 0.0
    %1648 = vmatprep.subr.mxu0 0.0
    %1649 = vmatpush1.msra.mxu0 0.0
    %1650 = vmatprep.subr.mxu0 0.0
    %1651 = vmatpush1.msra.mxu0 0.0
    %1652 = vmatprep.subr.mxu0 0.0
    %1653 = vmatpush1.msra.mxu0 0.0
    %1654 = vmatprep.subr.mxu0 0.0
    %1655 = vmatpush1.msra.mxu0 0.0
    %1656 = vmatprep.subr.mxu0 0.0
    %1657 = vmatpush1.msra.mxu0 0.0
    %1658 = vmatprep.subr.mxu0 0.0
    %1659 = vmatpush1.msra.mxu0 0.0
    %1660 = vmatprep.mubr.f32.mxu0 0.0
    %1661 = vmatmul.mubr.f32.gmra.mrb[0].mxu0 %v1573
    %v1662 = vpop.f32.mrb[0].mxu0
    %v1663 = vadd.f32 0.0, %v1662
    %v1664 = vpop.f32.mrb[0].mxu0
    %1665 = vmatprep.mubr.f32.mxu0 0.0
    %1666 = vmatmul.mubr.f32.gmra.mrb[0].mxu0 %v1576
    %v1667 = vpop.f32.mrb[0].mxu0
    %v1668 = vadd.f32 0.0, %v1667
    %v1669 = vpop.f32.mrb[0].mxu0
    %1670 = vmatprep.mubr.f32.mxu0 0.0
    %1671 = vmatmul.mubr.f32.gmra.mrb[0].mxu0 %v1579
    %v1672 = vpop.f32.mrb[0].mxu0
    %v1673 = vadd.f32 0.0, %v1672
    %v1674 = vpop.f32.mrb[0].mxu0
    %1675 = vmatprep.mubr.f32.mxu0 0.0
    %1676 = vmatmul.mubr.f32.gmra.mrb[0].mxu0 %v1582
    %v1677 = vpop.f32.mrb[0].mxu0
    %v1678 = vadd.f32 0.0, %v1677
    %v1679 = vpop.f32.mrb[0].mxu0
    %1680 = vmatprep.mubr.f32.mxu0 0.0
    %1681 = vmatmul.mubr.f32.gmra.mrb[0].mxu0 %v1585
    %v1682 = vpop.f32.mrb[0].mxu0
    %v1683 = vadd.f32 0.0, %v1682
    %v1684 = vpop.f32.mrb[0].mxu0
    %1685 = vmatprep.mubr.f32.mxu0 0.0
    %1686 = vmatmul.mubr.f32.gmra.mrb[0].mxu0 %v1588
    %v1687 = vpop.f32.mrb[0].mxu0
    %v1688 = vadd.f32 0.0, %v1687
    %v1689 = vpop.f32.mrb[0].mxu0
    %1690 = vmatprep.mubr.f32.mxu0 0.0
    %1691 = vmatmul.mubr.f32.gmra.mrb[0].mxu0 %v1591
    %v1692 = vpop.f32.mrb[0].mxu0
    %v1693 = vadd.f32 0.0, %v1692
    %v1694 = vpop.f32.mrb[0].mxu0
    %1695 = vmatprep.mubr.f32.mxu0 0.0
    %1696 = vmatmul.mubr.f32.gmra.mrb[0].mxu0 %v1594
    %v1697 = vpop.f32.mrb[0].mxu0
    %v1698 = vadd.f32 0.0, %v1697
    %v1699 = vpop.f32.mrb[0].mxu0
    %1700 = vdwg.mxu0
    %v1701 = vadd.f32 %v1523, %v1663
    %v1702 = vadd.f32 %v1524, %v1668
    %v1703 = vadd.f32 %v1525, %v1673
    %v1704 = vadd.f32 %v1526, %v1678
    %v1705 = vadd.f32 %v1527, %v1683
    %v1706 = vadd.f32 %v1528, %v1688
    %v1707 = vadd.f32 %v1529, %v1693
    %v1708 = vadd.f32 %v1530, %v1698
    %v1709 = vxor.u32 %v1701, 2147483648
    %v1710 = vxor.u32 %v1702, 2147483648
    %v1711 = vmul.f32 %v1709, 1.442695
    %v1712 = vpow.pop %v1711
    %v1713 = vmul.f32 %v1710, 1.442695
    %v1714 = vpow.pop %v1713
    %v1715 = vadd.f32 %v1712, 1.0
    %v1716 = vadd.f32 %v1714, 1.0
    %v1717 = vrcp.pop %v1715
    %v1718 = vmul.f32 1.0, %v1717
    %v1719 = vrcp.pop %v1716
    %v1720 = vmul.f32 1.0, %v1719
    %v1721 = vxor.u32 %v1703, 2147483648
    %v1722 = vxor.u32 %v1704, 2147483648
    %v1723 = vmul.f32 %v1721, 1.442695
    %v1724 = vpow.pop %v1723
    %v1725 = vmul.f32 %v1722, 1.442695
    %v1726 = vpow.pop %v1725
    %v1727 = vadd.f32 %v1724, 1.0
    %v1728 = vadd.f32 %v1726, 1.0
    %v1729 = vrcp.pop %v1727
    %v1730 = vmul.f32 1.0, %v1729
    %v1731 = vrcp.pop %v1728
    %v1732 = vmul.f32 1.0, %v1731
    %v1733 = vtanh.pop %v1705
    %v1734 = vtanh.pop %v1706
    %v1735 = vxor.u32 %v1707, 2147483648
    %v1736 = vxor.u32 %v1708, 2147483648
    %v1737 = vmul.f32 %v1735, 1.442695
    %v1738 = vpow.pop %v1737
    %v1739 = vmul.f32 %v1736, 1.442695
    %v1740 = vpow.pop %v1739
    %v1741 = vadd.f32 %v1738, 1.0
    %v1742 = vadd.f32 %v1740, 1.0
    %v1743 = vrcp.pop %v1741
    %v1744 = vmul.f32 1.0, %v1743
    %v1745 = vrcp.pop %v1742
    %v1746 = vmul.f32 1.0, %v1745
    %v1747 = vmul.f32 %v1730, %v1565
    %v1748 = vmul.f32 %v1732, %v1566
    %v1749 = vmul.f32 %v1718, %v1733
    %v1750 = vmul.f32 %v1720, %v1734
    %v1751 = vadd.f32 %v1747, %v1749
    %v1752 = vadd.f32 %v1748, %v1750
    %v1753 = vtanh.pop %v1751
    %v1754 = vtanh.pop %v1752
    %v1755 = vmul.f32 %v1744, %v1753
    %v1756 = vmul.f32 %v1746, %v1754
    %s1757 = scalar_lea.vmem %s16, 2
    %v1758 = vld [vmem:[%s1757] sm:$0x3]
    %v1760 = vsel %vm479, %v1758, 0
    %1762 = vmatprep.subr.mxu0 0.0
    %1763 = vmatpush1.msra.mxu0 %v1755
    %1764 = vmatprep.subr.mxu0 0.0
    %1765 = vmatpush1.msra.mxu0 %v1756
    %1766 = vmatprep.subr.mxu0 0.0
    %1767 = vmatpush1.msra.mxu0 0.0
    %1768 = vmatprep.subr.mxu0 0.0
    %1769 = vmatpush1.msra.mxu0 0.0
    %1770 = vmatprep.subr.mxu0 0.0
    %1771 = vmatpush1.msra.mxu0 0.0
    %1772 = vmatprep.subr.mxu0 0.0
    %1773 = vmatpush1.msra.mxu0 0.0
    %1774 = vmatprep.subr.mxu0 0.0
    %1775 = vmatpush1.msra.mxu0 0.0
    %1776 = vmatprep.subr.mxu0 0.0
    %1777 = vmatpush1.msra.mxu0 0.0
    %1778 = vmatprep.subr.mxu0 0.0
    %1779 = vmatpush1.msra.mxu0 0.0
    %1780 = vmatprep.subr.mxu0 0.0
    %1781 = vmatpush1.msra.mxu0 0.0
    %1782 = vmatprep.subr.mxu0 0.0
    %1783 = vmatpush1.msra.mxu0 0.0
    %1784 = vmatprep.subr.mxu0 0.0
    %1785 = vmatpush1.msra.mxu0 0.0
    %1786 = vmatprep.subr.mxu0 0.0
    %1787 = vmatpush1.msra.mxu0 0.0
    %1788 = vmatprep.subr.mxu0 0.0
    %1789 = vmatpush1.msra.mxu0 0.0
    %1790 = vmatprep.subr.mxu0 0.0
    %1791 = vmatpush1.msra.mxu0 0.0
    %1792 = vmatprep.subr.mxu0 0.0
    %1793 = vmatpush1.msra.mxu0 0.0
    %1794 = vmatprep.subr.mxu0 0.0
    %1795 = vmatpush1.msra.mxu0 0.0
    %1796 = vmatprep.subr.mxu0 0.0
    %1797 = vmatpush1.msra.mxu0 0.0
    %1798 = vmatprep.subr.mxu0 0.0
    %1799 = vmatpush1.msra.mxu0 0.0
    %1800 = vmatprep.subr.mxu0 0.0
    %1801 = vmatpush1.msra.mxu0 0.0
    %1802 = vmatprep.subr.mxu0 0.0
    %1803 = vmatpush1.msra.mxu0 0.0
    %1804 = vmatprep.subr.mxu0 0.0
    %1805 = vmatpush1.msra.mxu0 0.0
    %1806 = vmatprep.subr.mxu0 0.0
    %1807 = vmatpush1.msra.mxu0 0.0
    %1808 = vmatprep.subr.mxu0 0.0
    %1809 = vmatpush1.msra.mxu0 0.0
    %1810 = vmatprep.subr.mxu0 0.0
    %1811 = vmatpush1.msra.mxu0 0.0
    %1812 = vmatprep.subr.mxu0 0.0
    %1813 = vmatpush1.msra.mxu0 0.0
    %1814 = vmatprep.subr.mxu0 0.0
    %1815 = vmatpush1.msra.mxu0 0.0
    %1816 = vmatprep.subr.mxu0 0.0
    %1817 = vmatpush1.msra.mxu0 0.0
    %1818 = vmatprep.subr.mxu0 0.0
    %1819 = vmatpush1.msra.mxu0 0.0
    %1820 = vmatprep.subr.mxu0 0.0
    %1821 = vmatpush1.msra.mxu0 0.0
    %1822 = vmatprep.subr.mxu0 0.0
    %1823 = vmatpush1.msra.mxu0 0.0
    %1824 = vmatprep.subr.mxu0 0.0
    %1825 = vmatpush1.msra.mxu0 0.0
    %1826 = vmatprep.mubr.f32.mxu0 0.0
    %1827 = vmatmul.mubr.f32.gmra.mrb[0].mxu0 %v1760
    %v1828 = vpop.f32.mrb[0].mxu0
    %v1829 = vadd.f32 0.0, %v1828
    %v1830 = vpop.f32.mrb[0].mxu0
    %1831 = vdwg.mxu0
    %v1833 = vsel %vm479, %v1571, 0
    %1835 = vmatprep.subr.mxu0 0.0
    %1836 = vmatpush1.msra.mxu0 %v1569
    %1837 = vmatprep.subr.mxu0 0.0
    %1838 = vmatpush1.msra.mxu0 %v1570
    %1839 = vmatprep.subr.mxu0 0.0
    %1840 = vmatpush1.msra.mxu0 0.0
    %1841 = vmatprep.subr.mxu0 0.0
    %1842 = vmatpush1.msra.mxu0 0.0
    %1843 = vmatprep.subr.mxu0 0.0
    %1844 = vmatpush1.msra.mxu0 0.0
    %1845 = vmatprep.subr.mxu0 0.0
    %1846 = vmatpush1.msra.mxu0 0.0
    %1847 = vmatprep.subr.mxu0 0.0
    %1848 = vmatpush1.msra.mxu0 0.0
    %1849 = vmatprep.subr.mxu0 0.0
    %1850 = vmatpush1.msra.mxu0 0.0
    %1851 = vmatprep.subr.mxu0 0.0
    %1852 = vmatpush1.msra.mxu0 0.0
    %1853 = vmatprep.subr.mxu0 0.0
    %1854 = vmatpush1.msra.mxu0 0.0
    %1855 = vmatprep.subr.mxu0 0.0
    %1856 = vmatpush1.msra.mxu0 0.0
    %1857 = vmatprep.subr.mxu0 0.0
    %1858 = vmatpush1.msra.mxu0 0.0
    %1859 = vmatprep.subr.mxu0 0.0
    %1860 = vmatpush1.msra.mxu0 0.0
    %1861 = vmatprep.subr.mxu0 0.0
    %1862 = vmatpush1.msra.mxu0 0.0
    %1863 = vmatprep.subr.mxu0 0.0
    %1864 = vmatpush1.msra.mxu0 0.0
    %1865 = vmatprep.subr.mxu0 0.0
    %1866 = vmatpush1.msra.mxu0 0.0
    %1867 = vmatprep.subr.mxu0 0.0
    %1868 = vmatpush1.msra.mxu0 0.0
    %1869 = vmatprep.subr.mxu0 0.0
    %1870 = vmatpush1.msra.mxu0 0.0
    %1871 = vmatprep.subr.mxu0 0.0
    %1872 = vmatpush1.msra.mxu0 0.0
    %1873 = vmatprep.subr.mxu0 0.0
    %1874 = vmatpush1.msra.mxu0 0.0
    %1875 = vmatprep.subr.mxu0 0.0
    %1876 = vmatpush1.msra.mxu0 0.0
    %1877 = vmatprep.subr.mxu0 0.0
    %1878 = vmatpush1.msra.mxu0 0.0
    %1879 = vmatprep.subr.mxu0 0.0
    %1880 = vmatpush1.msra.mxu0 0.0
    %1881 = vmatprep.subr.mxu0 0.0
    %1882 = vmatpush1.msra.mxu0 0.0
    %1883 = vmatprep.subr.mxu0 0.0
    %1884 = vmatpush1.msra.mxu0 0.0
    %1885 = vmatprep.subr.mxu0 0.0
    %1886 = vmatpush1.msra.mxu0 0.0
    %1887 = vmatprep.subr.mxu0 0.0
    %1888 = vmatpush1.msra.mxu0 0.0
    %1889 = vmatprep.subr.mxu0 0.0
    %1890 = vmatpush1.msra.mxu0 0.0
    %1891 = vmatprep.subr.mxu0 0.0
    %1892 = vmatpush1.msra.mxu0 0.0
    %1893 = vmatprep.subr.mxu0 0.0
    %1894 = vmatpush1.msra.mxu0 0.0
    %1895 = vmatprep.subr.mxu0 0.0
    %1896 = vmatpush1.msra.mxu0 0.0
    %1897 = vmatprep.subr.mxu0 0.0
    %1898 = vmatpush1.msra.mxu0 0.0
    %1899 = vmatprep.mubr.f32.mxu0 0.0
    %1900 = vmatmul.mubr.f32.gmra.mrb[0].mxu0 %v1833
    %v1901 = vpop.f32.mrb[0].mxu0
    %v1902 = vadd.f32 %v1829, %v1901
    %v1903 = vpop.f32.mrb[0].mxu0
    %1904 = vdwg.mxu0
    %s1905 = sld [smem:[#allocation2]]
    %v1906 = vstv %s1905
    %v1907 = vadd.f32 %v1902, %v1906
    %vm1908 = vcmask 517120
    %1909 = vst.msk [vmem:[#allocation8] sm:$0x3] %vm1908, %v1907
    // Predicated region
    $region82: #{forward.1} parent=1 // pred_check
      _
    $region83: #{forward.1} parent=1 // pred_check_branch
      %1911 = sbr.rel (0) target = $region85
    $region84: #{forward.1} parent=1 // pred_region
      %s1913 = ssub.s32 32, 32
      %1914 = vsyncadd [#allocation5], %s1913
      %s1916 = sshll.u32 [#allocation8], 4
      %s1917 = int_to_ptr.vmem [resolvable:$true] %s1916
      %1919 = dma.vmem_to_hbm [thread:$0]  %s1917, 32, %s18, [#allocation5]
    $region85: #{forward.1} parent=1 // pred_fallthru
      _
    // Predicated region
    $region86: #{forward.1} parent=1 // pred_check
      _
    $region87: #{forward.1} parent=1 // pred_check_branch
      %1921 = sbr.rel (0) target = $region89
    $region88: #{forward.1} parent=1 // pred_region
      %1922 = dma.done [#allocation5], 32
    $region89: #{forward.1} parent=1 // pred_fallthru
      _
    %1923 = vsyncpa [#allocation4], 1
    %1924 = vsyncpa [#allocation7], 1
    %1925 = vsyncpa [#allocation5], 1

</llo_original>
